<compile_context>
chip_gen: v7x
topology: tpu7x:2x2x1
jax: 0.10.0
libtpu: 0.0.40
codegen_flags: <defaults>
</compile_context>

<pallas_src>
import jax
import jax.numpy as jnp
from jax.experimental import pallas as pl
from jax.experimental.pallas import tpu as pltpu

DDPG_EPS = 0.003


def _round_up(x, m):
    return (x + m - 1) // m * m


def _cdiv(a, b):
    return (a + b - 1) // b


# ------------------------------- kernel -------------------------------------

def critic_kernel(sa_ref, w1_ref, b1_ref, ws2_ref, bs2_ref,
                  w2_ref, b2_ref, w3t_ref, b3_ref, o_ref):
    """One batch tile: 3 MXU matmuls (K/N = 256-friendly) + VPU/XLU fc3."""
    cdt = sa_ref.dtype                      # operand dtype (bf16 by default)
    H = ws2_ref.shape[0]

    # Layer 1 (fcs1 & fca1 fused): [s1 | a1] = relu(sa @ blockdiag(Ws1,Wa1) + [bs1|ba1])
    sa1 = jnp.maximum(
        jnp.dot(sa_ref[...], w1_ref[...], preferred_element_type=jnp.float32)
        + b1_ref[...], 0.0)
    s1 = sa1[:, :H].astype(cdt)
    a1 = sa1[:, H:].astype(cdt)

    # fcs2: s2 = relu(s1 @ Ws2 + bs2)
    s2 = jnp.maximum(
        jnp.dot(s1, ws2_ref[...], preferred_element_type=jnp.float32)
        + bs2_ref[...], 0.0).astype(cdt)

    # fc2 on the concat, as a single K=2H matmul: h = relu([s2 | a1] @ W2 + b2)
    x = jnp.concatenate([s2, a1], axis=-1)
    h = jnp.maximum(
        jnp.dot(x, w2_ref[...], preferred_element_type=jnp.float32)
        + b2_ref[...], 0.0)

    # fc3 (H -> 1) on the VPU/XLU: q = sum(h * w3^T, axis=-1) + b3
    q = jnp.sum(h * w3t_ref[...], axis=-1, keepdims=True) + b3_ref[...]
    o_ref[...] = q.astype(o_ref.dtype)


# ----------------------------- param packing --------------------------------

def pack_params(params, compute_dtype=jnp.bfloat16):
    """One-time conversion of the module params into the kernel's fused layout."""
    ws1, bs1, ws2, bs2, wa1, ba1, w2, b2, w3, b3 = params
    S, H = ws1.shape
    A = wa1.shape[0]
    # Block-diagonal first-layer weight: sa @ W1 == [state @ Ws1 | action @ Wa1]
    w1 = jnp.zeros((S + A, 2 * H), jnp.float32)
    w1 = w1.at[:S, :H].set(ws1)
    w1 = w1.at[S:, H:].set(wa1)
    b1 = jnp.concatenate([bs1, ba1], axis=1)               # (1, 2H)
    return (
        w1.astype(compute_dtype),                           # (S+A, 2H)
        b1.astype(jnp.float32),                             # (1, 2H)
        ws2.astype(compute_dtype),                           # (H, H)
        bs2.astype(jnp.float32),                             # (1, H)
        w2.astype(compute_dtype),                             # (2H, H)
        b2.astype(jnp.float32),                               # (1, H)
        jnp.transpose(w3).astype(jnp.float32),                # (1, H)  VPU path, f32
        b3.astype(jnp.float32),                               # (1, 1)
    )


# ------------------------------- wrapper -------------------------------------

def critic_ddpg3_forward(state, action, packed, *,
                         tile_n=512,
                         vmem_limit_bytes=16 * 1024 * 1024):
    """state: [n, S], action: [n, A]  ->  Q(s,a): [n, 1] (float32)."""
    w1, b1, ws2, bs2, w2, b2, w3t, b3 = packed
    compute_dtype = w1.dtype
    n, S = state.shape
    A = action.shape[1]
    H = ws2.shape[0]
    SA = S + A

    # --- tile / grid sizing: >= 2 steps and an even count (v7x megacore),
    #     rows aligned to 16 for 16-bit operands (8 otherwise). ---------------
    row_align = 16 if jnp.dtype(compute_dtype).itemsize < 4 else 8
    tile_n = max(row_align, _round_up(tile_n, row_align))
    steps = _cdiv(n, tile_n)
    steps = max(2, steps + (steps % 2))
    tile_n = _round_up(_cdiv(n, steps), row_align)
    n_pad = tile_n * steps

    # --- single prep pass over activations: concat + cast (+ zero row pad) ---
    sa = jnp.concatenate([state, action], axis=1).astype(compute_dtype)
    if n_pad != n:
        sa = jnp.pad(sa, ((0, n_pad - n), (0, 0)))

    itemsize = jnp.dtype(compute_dtype).itemsize
    flops = 2 * n_pad * (SA * 2 * H + H * H + 2 * H * H + H)
    bytes_accessed = (n_pad * SA * itemsize                       # activations in
                      + (SA * 2 * H + H * H + 2 * H * H) * itemsize  # weights
                      + (2 * H + 2 * H + H + 1) * 4               # biases + w3^T (f32)
                      + n_pad * 4)                                # output
    cost = pl.CostEstimate(flops=flops, transcendentals=0,
                           bytes_accessed=bytes_accessed)

    const = lambda i: (0, 0)   # resident weights / biases

    out = pl.pallas_call(
        critic_kernel,
        out_shape=jax.ShapeDtypeStruct((n_pad, 1), jnp.float32),
        grid_spec=pltpu.PrefetchScalarGridSpec(
            num_scalar_prefetch=0,
            grid=(steps,),
            in_specs=[
                pl.BlockSpec((tile_n, SA), lambda i: (i, 0)),   # [state | action] tile
                pl.BlockSpec((SA, 2 * H), const),               # blockdiag(Ws1, Wa1)
                pl.BlockSpec((1, 2 * H), const),                # [bs1 | ba1]
                pl.BlockSpec((H, H), const),                    # Ws2
                pl.BlockSpec((1, H), const),                    # bs2
                pl.BlockSpec((2 * H, H), const),                # W2 (single K=2H)
                pl.BlockSpec((1, H), const),                    # b2
                pl.BlockSpec((1, H), const),                    # W3^T (f32, VPU path)
                pl.BlockSpec((1, 1), const),                    # b3
            ],
            out_specs=pl.BlockSpec((tile_n, 1), lambda i: (i, 0)),
        ),
        compiler_params=pltpu.CompilerParams(
            dimension_semantics=("parallel",),
            vmem_limit_bytes=vmem_limit_bytes,
        ),
        cost_estimate=cost,
    )(sa, w1, b1, ws2, bs2, w2, b2, w3t, b3)

    return out[:n]


# --------------------------- init & reference --------------------------------

def init_params(key, state_dim, action_dim, hidden_s):
    """Mimics the PyTorch module init. Weights stored transposed: (in, out)."""
    ks = jax.random.split(key, 10)
    H = hidden_s
    u = lambda k, shp, b: jax.random.uniform(k, shp, jnp.float32, -b, b)
    bw = 1.0 / jnp.sqrt(H)                   # fanin_init uses weight.size(0) = H
    ws1 = u(ks[0], (state_dim, H), bw)
    bs1 = u(ks[1], (1, H), 1.0 / jnp.sqrt(state_dim))
    ws2 = u(ks[2], (H, H), bw)
    bs2 = u(ks[3], (1, H), 1.0 / jnp.sqrt(H))
    wa1 = u(ks[4], (action_dim, H), bw)
    ba1 = u(ks[5], (1, H), 1.0 / jnp.sqrt(action_dim))
    w2 = u(ks[6], (2 * H, H), bw)
    b2 = u(ks[7], (1, H), 1.0 / jnp.sqrt(2 * H))
    w3 = u(ks[8], (H, 1), DDPG_EPS)
    b3 = u(ks[9], (1, 1), 1.0 / jnp.sqrt(H))
    return (ws1, bs1, ws2, bs2, wa1, ba1, w2, b2, w3, b3)


def critic_ref(state, action, params):
    """Plain-JAX reference with the real concat (matches the PyTorch forward)."""
    ws1, bs1, ws2, bs2, wa1, ba1, w2, b2, w3, b3 = params
    s1 = jax.nn.relu(state @ ws1 + bs1)
    s2 = jax.nn.relu(s1 @ ws2 + bs2)
    a1 = jax.nn.relu(action @ wa1 + ba1)
    x = jnp.concatenate([s2, a1], axis=1)
    h = jax.nn.relu(x @ w2 + b2)
    return h @ w3 + b3


if __name__ == "__main__":
    key = jax.random.PRNGKey(0)
    kx, ka, kp = jax.random.split(key, 3)

    STATE_DIM, ACTION_DIM, HIDDEN_S = 17, 6, 128
    N = 1000   # not a multiple of the tile -> exercises the zero-pad path

    state = jax.random.normal(kx, (N, STATE_DIM), jnp.float32)
    action = jax.random.uniform(ka, (N, ACTION_DIM), jnp.float32, -1.0, 1.0)
    params = init_params(kp, STATE_DIM, ACTION_DIM, HIDDEN_S)
    ref = critic_ref(state, action, params)

    # Default path: bf16 operands (MXU-native), f32 accumulation, packed once.
    packed_bf16 = pack_params(params, jnp.bfloat16)
    out = jax.block_until_ready(critic_ddpg3_forward(state, action, packed_bf16))
    assert out.shape == (N, 1)
    assert jnp.allclose(out, ref, atol=5e-2, rtol=5e-2), \
        float(jnp.max(jnp.abs(out - ref)))

    # f32 operand path: tight check that the fused structure is exact.
    packed_f32 = pack_params(params, jnp.float32)
    out_f32 = jax.block_until_ready(
        critic_ddpg3_forward(state, action, packed_f32, tile_n=256))
    assert out_f32.shape == (N, 1)
    assert jnp.allclose(out_f32, ref, atol=1e-4, rtol=1e-4), \
        float(jnp.max(jnp.abs(out_f32 - ref)))

    print("KERNEL_OK")
</pallas_src>

<mosaic_0001>
module attributes {stable_mosaic.version = 11 : i64} {
  func.func @critic_kernel(%arg0: i32, %arg1: memref<512x23xbf16, #tpu.memory_space<vmem>>, %arg2: memref<23x256xbf16, #tpu.memory_space<vmem>>, %arg3: memref<1x256xf32, #tpu.memory_space<vmem>>, %arg4: memref<128x128xbf16, #tpu.memory_space<vmem>>, %arg5: memref<1x128xf32, #tpu.memory_space<vmem>>, %arg6: memref<256x128xbf16, #tpu.memory_space<vmem>>, %arg7: memref<1x128xf32, #tpu.memory_space<vmem>>, %arg8: memref<1x128xf32, #tpu.memory_space<vmem>>, %arg9: memref<1x1xf32, #tpu.memory_space<vmem>>, %arg10: memref<512x1xf32, #tpu.memory_space<vmem>>) attributes {dimension_semantics = [#tpu.dimension_semantics<parallel>], iteration_bounds = array<i64: 2>, scalar_prefetch = 0 : i64, scratch_operands = 0 : i64, tpu.core_type = #tpu.core_type<tc>, window_params = [{transform_indices = @transform_0, window_bounds = array<i64: 512, 23>}, {pipeline_mode = #tpu.pipeline_mode<synchronous>, transform_indices = @transform_1, window_bounds = array<i64: 23, 256>}, {pipeline_mode = #tpu.pipeline_mode<synchronous>, transform_indices = @transform_2, window_bounds = array<i64: 1, 256>}, {pipeline_mode = #tpu.pipeline_mode<synchronous>, transform_indices = @transform_3, window_bounds = array<i64: 128, 128>}, {pipeline_mode = #tpu.pipeline_mode<synchronous>, transform_indices = @transform_4, window_bounds = array<i64: 1, 128>}, {pipeline_mode = #tpu.pipeline_mode<synchronous>, transform_indices = @transform_5, window_bounds = array<i64: 256, 128>}, {pipeline_mode = #tpu.pipeline_mode<synchronous>, transform_indices = @transform_6, window_bounds = array<i64: 1, 128>}, {pipeline_mode = #tpu.pipeline_mode<synchronous>, transform_indices = @transform_7, window_bounds = array<i64: 1, 128>}, {pipeline_mode = #tpu.pipeline_mode<synchronous>, transform_indices = @transform_8, window_bounds = array<i64: 1, 1>}, {transform_indices = @transform_9, window_bounds = array<i64: 512, 1>}]} {
    %c0 = arith.constant 0 : index
    %c0_0 = arith.constant 0 : index
    %0 = vector.load %arg1[%c0, %c0_0] : memref<512x23xbf16, #tpu.memory_space<vmem>>, vector<512x23xbf16>
    %c0_1 = arith.constant 0 : index
    %c0_2 = arith.constant 0 : index
    %1 = vector.load %arg2[%c0_1, %c0_2] : memref<23x256xbf16, #tpu.memory_space<vmem>>, vector<23x256xbf16>
    %cst = arith.constant dense<0.000000e+00> : vector<512x256xf32>
    %2 = tpu.matmul %0, %1, %cst {dimension_numbers = #tpu.dot_dimension_numbers<[1], [0], [0], [1], [0, 0, 1, 1], [], []>} : vector<512x23xbf16>, vector<23x256xbf16>, vector<512x256xf32> -> vector<512x256xf32>
    %c0_3 = arith.constant 0 : index
    %c0_4 = arith.constant 0 : index
    %3 = vector.load %arg3[%c0_3, %c0_4] : memref<1x256xf32, #tpu.memory_space<vmem>>, vector<1x256xf32>
    %4 = vector.broadcast %3 : vector<1x256xf32> to vector<512x256xf32>
    %5 = arith.addf %2, %4 : vector<512x256xf32>
    %cst_5 = arith.constant 0.000000e+00 : f32
    %6 = vector.broadcast %cst_5 : f32 to vector<512x256xf32>
    %7 = arith.maximumf %5, %6 : vector<512x256xf32>
    %8 = vector.extract_strided_slice %7 {offsets = [0, 0], sizes = [512, 128], strides = [1, 1]} : vector<512x256xf32> to vector<512x128xf32>
    %9 = arith.truncf %8 : vector<512x128xf32> to vector<512x128xbf16>
    %10 = vector.extract_strided_slice %7 {offsets = [0, 128], sizes = [512, 128], strides = [1, 1]} : vector<512x256xf32> to vector<512x128xf32>
    %11 = arith.truncf %10 : vector<512x128xf32> to vector<512x128xbf16>
    %c0_6 = arith.constant 0 : index
    %c0_7 = arith.constant 0 : index
    %12 = vector.load %arg4[%c0_6, %c0_7] : memref<128x128xbf16, #tpu.memory_space<vmem>>, vector<128x128xbf16>
    %cst_8 = arith.constant dense<0.000000e+00> : vector<512x128xf32>
    %13 = tpu.matmul %9, %12, %cst_8 {dimension_numbers = #tpu.dot_dimension_numbers<[1], [0], [0], [1], [0, 0, 1, 1], [], []>} : vector<512x128xbf16>, vector<128x128xbf16>, vector<512x128xf32> -> vector<512x128xf32>
    %c0_9 = arith.constant 0 : index
    %c0_10 = arith.constant 0 : index
    %14 = vector.load %arg5[%c0_9, %c0_10] : memref<1x128xf32, #tpu.memory_space<vmem>>, vector<1x128xf32>
    %15 = vector.broadcast %14 : vector<1x128xf32> to vector<512x128xf32>
    %16 = arith.addf %13, %15 : vector<512x128xf32>
    %cst_11 = arith.constant 0.000000e+00 : f32
    %17 = vector.broadcast %cst_11 : f32 to vector<512x128xf32>
    %18 = arith.maximumf %16, %17 : vector<512x128xf32>
    %19 = arith.truncf %18 : vector<512x128xf32> to vector<512x128xbf16>
    %20 = tpu.concatenate %19, %11 in 1 : vector<512x128xbf16>, vector<512x128xbf16> -> vector<512x256xbf16>
    %c0_12 = arith.constant 0 : index
    %c0_13 = arith.constant 0 : index
    %21 = vector.load %arg6[%c0_12, %c0_13] : memref<256x128xbf16, #tpu.memory_space<vmem>>, vector<256x128xbf16>
    %cst_14 = arith.constant dense<0.000000e+00> : vector<512x128xf32>
    %22 = tpu.matmul %20, %21, %cst_14 {dimension_numbers = #tpu.dot_dimension_numbers<[1], [0], [0], [1], [0, 0, 1, 1], [], []>} : vector<512x256xbf16>, vector<256x128xbf16>, vector<512x128xf32> -> vector<512x128xf32>
    %c0_15 = arith.constant 0 : index
    %c0_16 = arith.constant 0 : index
    %23 = vector.load %arg7[%c0_15, %c0_16] : memref<1x128xf32, #tpu.memory_space<vmem>>, vector<1x128xf32>
    %24 = vector.broadcast %23 : vector<1x128xf32> to vector<512x128xf32>
    %25 = arith.addf %22, %24 : vector<512x128xf32>
    %cst_17 = arith.constant 0.000000e+00 : f32
    %26 = vector.broadcast %cst_17 : f32 to vector<512x128xf32>
    %27 = arith.maximumf %25, %26 : vector<512x128xf32>
    %c0_18 = arith.constant 0 : index
    %c0_19 = arith.constant 0 : index
    %28 = vector.load %arg8[%c0_18, %c0_19] : memref<1x128xf32, #tpu.memory_space<vmem>>, vector<1x128xf32>
    %29 = vector.broadcast %28 : vector<1x128xf32> to vector<512x128xf32>
    %30 = arith.mulf %27, %29 : vector<512x128xf32>
    %cst_20 = arith.constant dense<0.000000e+00> : vector<512xf32>
    %31 = vector.multi_reduction <add>, %30, %cst_20 [1] : vector<512x128xf32> to vector<512xf32>
    %32 = vector.shape_cast %31 : vector<512xf32> to vector<512x1xf32>
    %c0_21 = arith.constant 0 : index
    %c0_22 = arith.constant 0 : index
    %33 = vector.load %arg9[%c0_21, %c0_22] : memref<1x1xf32, #tpu.memory_space<vmem>>, vector<1x1xf32>
    %34 = vector.broadcast %33 : vector<1x1xf32> to vector<512x1xf32>
    %35 = arith.addf %32, %34 : vector<512x1xf32>
    %c0_23 = arith.constant 0 : index
    %c0_24 = arith.constant 0 : index
    %36 = vector.load %arg10[%c0_23, %c0_24] : memref<512x1xf32, #tpu.memory_space<vmem>>, vector<512x1xf32>
    tpu.vector_store %arg10[%c0_23, %c0_24], %35 {strides = array<i32>} : memref<512x1xf32, #tpu.memory_space<vmem>>, vector<512x1xf32>,
    return
  }
  func.func @transform_0(%arg0: i32) -> (i32, i32) {
    %c0_i32 = arith.constant 0 : i32
    %c0_i32_0 = arith.constant 0 : i32
    return %arg0, %c0_i32 : i32, i32
  }
  func.func @transform_1(%arg0: i32) -> (i32, i32) {
    %c0_i32 = arith.constant 0 : i32
    %c0_i32_0 = arith.constant 0 : i32
    %c0_i32_1 = arith.constant 0 : i32
    return %c0_i32, %c0_i32_0 : i32, i32
  }
  func.func @transform_2(%arg0: i32) -> (i32, i32) {
    %c0_i32 = arith.constant 0 : i32
    %c0_i32_0 = arith.constant 0 : i32
    %c0_i32_1 = arith.constant 0 : i32
    return %c0_i32, %c0_i32_0 : i32, i32
  }
  func.func @transform_3(%arg0: i32) -> (i32, i32) {
    %c0_i32 = arith.constant 0 : i32
    %c0_i32_0 = arith.constant 0 : i32
    %c0_i32_1 = arith.constant 0 : i32
    return %c0_i32, %c0_i32_0 : i32, i32
  }
  func.func @transform_4(%arg0: i32) -> (i32, i32) {
    %c0_i32 = arith.constant 0 : i32
    %c0_i32_0 = arith.constant 0 : i32
    %c0_i32_1 = arith.constant 0 : i32
    return %c0_i32, %c0_i32_0 : i32, i32
  }
  func.func @transform_5(%arg0: i32) -> (i32, i32) {
    %c0_i32 = arith.constant 0 : i32
    %c0_i32_0 = arith.constant 0 : i32
    %c0_i32_1 = arith.constant 0 : i32
    return %c0_i32, %c0_i32_0 : i32, i32
  }
  func.func @transform_6(%arg0: i32) -> (i32, i32) {
    %c0_i32 = arith.constant 0 : i32
    %c0_i32_0 = arith.constant 0 : i32
    %c0_i32_1 = arith.constant 0 : i32
    return %c0_i32, %c0_i32_0 : i32, i32
  }
  func.func @transform_7(%arg0: i32) -> (i32, i32) {
    %c0_i32 = arith.constant 0 : i32
    %c0_i32_0 = arith.constant 0 : i32
    %c0_i32_1 = arith.constant 0 : i32
    return %c0_i32, %c0_i32_0 : i32, i32
  }
  func.func @transform_8(%arg0: i32) -> (i32, i32) {
    %c0_i32 = arith.constant 0 : i32
    %c0_i32_0 = arith.constant 0 : i32
    %c0_i32_1 = arith.constant 0 : i32
    return %c0_i32, %c0_i32_0 : i32, i32
  }
  func.func @transform_9(%arg0: i32) -> (i32, i32) {
    %c0_i32 = arith.constant 0 : i32
    %c0_i32_0 = arith.constant 0 : i32
    return %arg0, %c0_i32 : i32, i32
  }
}

</mosaic_0001>

<llo_original>
// kernel: tpu_custom_call.1
$region0: #{tpu_custom_call.1}
  #allocation0 [shape = 'u32[]', space=smem, size = 0x4, offset = 0x4, fixed_abs, tag = 'smem constant byte address 0x4 - core index']
  #allocation1 [shape = 'u32[144,128]{1,0:T(1,128)}', space=vmem, size = 0x12000, scoped, tag = 'internal scratch']
  #allocation2 [shape = 'f32[1,1]{1,0:T(1,128)S(1)}', space=vmem, size = 0x200, scoped, tag = 'scoped memory for tpu_custom_call.1']
  %s0 = inlined_call_operand.vmem [shape: bf16[1024,23], index: 0, kind: input, shape index: {}]
  %s1 = inlined_call_operand.vmem [shape: bf16[23,256], index: 1, kind: input, shape index: {}]
  %s2 = inlined_call_operand.vmem [shape: f32[1,256], index: 2, kind: input, shape index: {}]
  %s3 = inlined_call_operand.vmem [shape: bf16[128,128], index: 3, kind: input, shape index: {}]
  %s4 = inlined_call_operand.vmem [shape: f32[1,128], index: 4, kind: input, shape index: {}]
  %s5 = inlined_call_operand.vmem [shape: bf16[256,128], index: 5, kind: input, shape index: {}]
  %s6 = inlined_call_operand.vmem [shape: f32[1,128], index: 6, kind: input, shape index: {}]
  %s7 = inlined_call_operand.vmem [shape: f32[1,128], index: 7, kind: input, shape index: {}]
  %s8 = inlined_call_operand.<no memory space> [shape: f32[1,1], index: 8, kind: input, shape index: {}]
  %s9 = inlined_call_operand.vmem [shape: f32[1024,1], index: 9, kind: output, shape index: {}]
  %s10 = sld [smem:[#allocation0]]
  $region69: #{tpu_custom_call.1} parent=0
    _
  %s12 = ssub.s32 1, %s10
  %s13 = scalar_select 0, %s12, %s10
  %v14 = vstv %s8
  %15 = vst [vmem:[#allocation2] sm:$0x1] %v14
  loop: start=0, step=1, limit=4
  $region2: #{tpu_custom_call.1} parent=0 // loop_pre_header
    _
  $region3: #{tpu_custom_call.1} parent=0 // loop_header
    %s17 = sphi 0, %s21
    %p18 = scmp.ge.s32.totalorder %s17, 4
    %s27 = sphi 0, %s29
    %s30 = sphi 0, %s27
    %s31 = sphi 0, %s30
    %s47 = sphi 0, %s31
    %s51 = sphi 0, %s51
    %s53 = sphi 0, %s51
    %s54 = sphi 0, %s53
    %s68 = sphi 0, %s54
    %s72 = sphi 0, %s72
    %s74 = sphi 0, %s72
    %s75 = sphi 0, %s74
    %s89 = sphi 0, %s75
    %s93 = sphi 0, %s93
    %s95 = sphi 0, %s93
    %s96 = sphi 0, %s95
    %s110 = sphi 0, %s96
    %s114 = sphi 0, %s114
    %s116 = sphi 0, %s114
    %s117 = sphi 0, %s116
    %s131 = sphi 0, %s117
    %s135 = sphi 0, %s135
    %s137 = sphi 0, %s135
    %s138 = sphi 0, %s137
    %s152 = sphi 0, %s138
    %s156 = sphi 0, %s156
    %s158 = sphi 0, %s156
    %s159 = sphi 0, %s158
    %s173 = sphi 0, %s159
    %s177 = sphi 0, %s177
    %s179 = sphi 0, %s177
    %s180 = sphi 0, %s179
    %s194 = sphi 0, %s180
    %s198 = sphi 0, %s198
    %s200 = sphi 0, %s198
    %s201 = sphi 0, %s200
    %s215 = sphi 0, %s201
    %s221 = sphi 0, %s223
    %s224 = sphi 0, %s221
    %s225 = sphi 0, %s224
    %s241 = sphi 0, %s225
  $region4: #{tpu_custom_call.1} parent=0 // loop_header_branch
    %20 = sbr.rel (%p18) target = $region8
  $region5: #{tpu_custom_call.1} parent=0 // loop_body
    %s22 = ssub.s32 %s17, 1
    %s23 = ssub.s32 %s17, 2
    %s24 = sadd.s32 %s17, 1
    %s25 = ssub.s32 %s17, %s24
    %p26 = scmp.eq.s32.totalorder %s25, 0
    %s28 = sadd.s32 %s27, 1
    %s29 = scalar_select %p26, %s27, %s28
    %p32 = pneg %p26
    %p33 = scmp.eq.s32.totalorder %s17, 1
    %p34 = por %p32, %p33
    %p35 = scmp.ne.s32.totalorder %s27, %s30
    %p36 = scmp.eq.s32.totalorder %s17, 0
    %p37 = por %p35, %p36
    %p38 = scmp.ne.s32.totalorder %s27, %s30
    %p39 = scmp.eq.s32.totalorder %s22, 1
    %p40 = por %p38, %p39
    %p41 = scmp.ne.s32.totalorder %s30, %s31
    %p42 = scmp.eq.s32.totalorder %s22, 0
    %p43 = por %p41, %p42
    %p44 = scmp.ne.s32.totalorder %s30, %s31
    %p45 = scmp.eq.s32.totalorder %s23, 1
    %p46 = por %p44, %p45
    %p48 = scmp.ne.s32.totalorder %s31, %s47
    %p49 = scmp.eq.s32.totalorder %s23, 0
    %p50 = por %p48, %p49
    %s52 = sadd.s32 %s51, 1
    %p55 = scmp.eq.s32.totalorder %s17, 1
    %p56 = scmp.ne.s32.totalorder %s51, %s53
    %p57 = scmp.eq.s32.totalorder %s17, 0
    %p58 = por %p56, %p57
    %p59 = scmp.ne.s32.totalorder %s51, %s53
    %p60 = scmp.eq.s32.totalorder %s22, 1
    %p61 = por %p59, %p60
    %p62 = scmp.ne.s32.totalorder %s53, %s54
    %p63 = scmp.eq.s32.totalorder %s22, 0
    %p64 = por %p62, %p63
    %p65 = scmp.ne.s32.totalorder %s53, %s54
    %p66 = scmp.eq.s32.totalorder %s23, 1
    %p67 = por %p65, %p66
    %p69 = scmp.ne.s32.totalorder %s54, %s68
    %p70 = scmp.eq.s32.totalorder %s23, 0
    %p71 = por %p69, %p70
    %s73 = sadd.s32 %s72, 1
    %p76 = scmp.eq.s32.totalorder %s17, 1
    %p77 = scmp.ne.s32.totalorder %s72, %s74
    %p78 = scmp.eq.s32.totalorder %s17, 0
    %p79 = por %p77, %p78
    %p80 = scmp.ne.s32.totalorder %s72, %s74
    %p81 = scmp.eq.s32.totalorder %s22, 1
    %p82 = por %p80, %p81
    %p83 = scmp.ne.s32.totalorder %s74, %s75
    %p84 = scmp.eq.s32.totalorder %s22, 0
    %p85 = por %p83, %p84
    %p86 = scmp.ne.s32.totalorder %s74, %s75
    %p87 = scmp.eq.s32.totalorder %s23, 1
    %p88 = por %p86, %p87
    %p90 = scmp.ne.s32.totalorder %s75, %s89
    %p91 = scmp.eq.s32.totalorder %s23, 0
    %p92 = por %p90, %p91
    %s94 = sadd.s32 %s93, 1
    %p97 = scmp.eq.s32.totalorder %s17, 1
    %p98 = scmp.ne.s32.totalorder %s93, %s95
    %p99 = scmp.eq.s32.totalorder %s17, 0
    %p100 = por %p98, %p99
    %p101 = scmp.ne.s32.totalorder %s93, %s95
    %p102 = scmp.eq.s32.totalorder %s22, 1
    %p103 = por %p101, %p102
    %p104 = scmp.ne.s32.totalorder %s95, %s96
    %p105 = scmp.eq.s32.totalorder %s22, 0
    %p106 = por %p104, %p105
    %p107 = scmp.ne.s32.totalorder %s95, %s96
    %p108 = scmp.eq.s32.totalorder %s23, 1
    %p109 = por %p107, %p108
    %p111 = scmp.ne.s32.totalorder %s96, %s110
    %p112 = scmp.eq.s32.totalorder %s23, 0
    %p113 = por %p111, %p112
    %s115 = sadd.s32 %s114, 1
    %p118 = scmp.eq.s32.totalorder %s17, 1
    %p119 = scmp.ne.s32.totalorder %s114, %s116
    %p120 = scmp.eq.s32.totalorder %s17, 0
    %p121 = por %p119, %p120
    %p122 = scmp.ne.s32.totalorder %s114, %s116
    %p123 = scmp.eq.s32.totalorder %s22, 1
    %p124 = por %p122, %p123
    %p125 = scmp.ne.s32.totalorder %s116, %s117
    %p126 = scmp.eq.s32.totalorder %s22, 0
    %p127 = por %p125, %p126
    %p128 = scmp.ne.s32.totalorder %s116, %s117
    %p129 = scmp.eq.s32.totalorder %s23, 1
    %p130 = por %p128, %p129
    %p132 = scmp.ne.s32.totalorder %s117, %s131
    %p133 = scmp.eq.s32.totalorder %s23, 0
    %p134 = por %p132, %p133
    %s136 = sadd.s32 %s135, 1
    %p139 = scmp.eq.s32.totalorder %s17, 1
    %p140 = scmp.ne.s32.totalorder %s135, %s137
    %p141 = scmp.eq.s32.totalorder %s17, 0
    %p142 = por %p140, %p141
    %p143 = scmp.ne.s32.totalorder %s135, %s137
    %p144 = scmp.eq.s32.totalorder %s22, 1
    %p145 = por %p143, %p144
    %p146 = scmp.ne.s32.totalorder %s137, %s138
    %p147 = scmp.eq.s32.totalorder %s22, 0
    %p148 = por %p146, %p147
    %p149 = scmp.ne.s32.totalorder %s137, %s138
    %p150 = scmp.eq.s32.totalorder %s23, 1
    %p151 = por %p149, %p150
    %p153 = scmp.ne.s32.totalorder %s138, %s152
    %p154 = scmp.eq.s32.totalorder %s23, 0
    %p155 = por %p153, %p154
    %s157 = sadd.s32 %s156, 1
    %p160 = scmp.eq.s32.totalorder %s17, 1
    %p161 = scmp.ne.s32.totalorder %s156, %s158
    %p162 = scmp.eq.s32.totalorder %s17, 0
    %p163 = por %p161, %p162
    %p164 = scmp.ne.s32.totalorder %s156, %s158
    %p165 = scmp.eq.s32.totalorder %s22, 1
    %p166 = por %p164, %p165
    %p167 = scmp.ne.s32.totalorder %s158, %s159
    %p168 = scmp.eq.s32.totalorder %s22, 0
    %p169 = por %p167, %p168
    %p170 = scmp.ne.s32.totalorder %s158, %s159
    %p171 = scmp.eq.s32.totalorder %s23, 1
    %p172 = por %p170, %p171
    %p174 = scmp.ne.s32.totalorder %s159, %s173
    %p175 = scmp.eq.s32.totalorder %s23, 0
    %p176 = por %p174, %p175
    %s178 = sadd.s32 %s177, 1
    %p181 = scmp.eq.s32.totalorder %s17, 1
    %p182 = scmp.ne.s32.totalorder %s177, %s179
    %p183 = scmp.eq.s32.totalorder %s17, 0
    %p184 = por %p182, %p183
    %p185 = scmp.ne.s32.totalorder %s177, %s179
    %p186 = scmp.eq.s32.totalorder %s22, 1
    %p187 = por %p185, %p186
    %p188 = scmp.ne.s32.totalorder %s179, %s180
    %p189 = scmp.eq.s32.totalorder %s22, 0
    %p190 = por %p188, %p189
    %p191 = scmp.ne.s32.totalorder %s179, %s180
    %p192 = scmp.eq.s32.totalorder %s23, 1
    %p193 = por %p191, %p192
    %p195 = scmp.ne.s32.totalorder %s180, %s194
    %p196 = scmp.eq.s32.totalorder %s23, 0
    %p197 = por %p195, %p196
    %s199 = sadd.s32 %s198, 1
    %p202 = scmp.eq.s32.totalorder %s17, 1
    %p203 = scmp.ne.s32.totalorder %s198, %s200
    %p204 = scmp.eq.s32.totalorder %s17, 0
    %p205 = por %p203, %p204
    %p206 = scmp.ne.s32.totalorder %s198, %s200
    %p207 = scmp.eq.s32.totalorder %s22, 1
    %p208 = por %p206, %p207
    %p209 = scmp.ne.s32.totalorder %s200, %s201
    %p210 = scmp.eq.s32.totalorder %s22, 0
    %p211 = por %p209, %p210
    %p212 = scmp.ne.s32.totalorder %s200, %s201
    %p213 = scmp.eq.s32.totalorder %s23, 1
    %p214 = por %p212, %p213
    %p216 = scmp.ne.s32.totalorder %s201, %s215
    %p217 = scmp.eq.s32.totalorder %s23, 0
    %p218 = por %p216, %p217
    %s219 = ssub.s32 %s17, %s24
    %p220 = scmp.eq.s32.totalorder %s219, 0
    %s222 = sadd.s32 %s221, 1
    %s223 = scalar_select %p220, %s221, %s222
    %p226 = pneg %p220
    %p227 = scmp.eq.s32.totalorder %s17, 1
    %p228 = por %p226, %p227
    %p229 = scmp.ne.s32.totalorder %s221, %s224
    %p230 = scmp.eq.s32.totalorder %s17, 0
    %p231 = por %p229, %p230
    %p232 = scmp.ne.s32.totalorder %s221, %s224
    %p233 = scmp.eq.s32.totalorder %s22, 1
    %p234 = por %p232, %p233
    %p235 = scmp.ne.s32.totalorder %s224, %s225
    %p236 = scmp.eq.s32.totalorder %s22, 0
    %p237 = por %p235, %p236
    %p238 = scmp.ne.s32.totalorder %s224, %s225
    %p239 = scmp.eq.s32.totalorder %s23, 1
    %p240 = por %p238, %p239
    %p242 = scmp.ne.s32.totalorder %s225, %s241
    %p243 = scmp.eq.s32.totalorder %s23, 0
    %p244 = por %p242, %p243
    %p245 = scmp.le.s32.totalorder 1, %s17
    %p246 = scmp.lt.s32.totalorder %s17, 3
    %p247 = pnand %p245, %p246
    %p248 = pneg %p247
    // Predicated region
    $region9: #{tpu_custom_call.1} parent=5 // pred_check
      _
    $region10: #{tpu_custom_call.1} parent=5 // pred_check_branch
      %250 = sbr.rel (%p247) target = $region12
    $region11: #{tpu_custom_call.1} parent=5 // pred_region
      %s251 = ssub.s32 %s17, 1
      // Predicated region
      $region13: #{tpu_custom_call.1} parent=11 // pred_check
        %p252 = pneg %p64
      $region14: #{tpu_custom_call.1} parent=11 // pred_check_branch
        %254 = sbr.rel (%p252) target = $region16
      $region15: #{tpu_custom_call.1} parent=11 // pred_region
        _
      $region16: #{tpu_custom_call.1} parent=11 // pred_fallthru
        _
      // Predicated region
      $region17: #{tpu_custom_call.1} parent=11 // pred_check
        %p255 = pneg %p85
      $region18: #{tpu_custom_call.1} parent=11 // pred_check_branch
        %257 = sbr.rel (%p255) target = $region20
      $region19: #{tpu_custom_call.1} parent=11 // pred_region
        _
      $region20: #{tpu_custom_call.1} parent=11 // pred_fallthru
        _
      // Predicated region
      $region21: #{tpu_custom_call.1} parent=11 // pred_check
        %p258 = pneg %p106
      $region22: #{tpu_custom_call.1} parent=11 // pred_check_branch
        %260 = sbr.rel (%p258) target = $region24
      $region23: #{tpu_custom_call.1} parent=11 // pred_region
        _
      $region24: #{tpu_custom_call.1} parent=11 // pred_fallthru
        _
      // Predicated region
      $region25: #{tpu_custom_call.1} parent=11 // pred_check
        %p261 = pneg %p127
      $region26: #{tpu_custom_call.1} parent=11 // pred_check_branch
        %263 = sbr.rel (%p261) target = $region28
      $region27: #{tpu_custom_call.1} parent=11 // pred_region
        _
      $region28: #{tpu_custom_call.1} parent=11 // pred_fallthru
        _
      // Predicated region
      $region29: #{tpu_custom_call.1} parent=11 // pred_check
        %p264 = pneg %p148
      $region30: #{tpu_custom_call.1} parent=11 // pred_check_branch
        %266 = sbr.rel (%p264) target = $region32
      $region31: #{tpu_custom_call.1} parent=11 // pred_region
        _
      $region32: #{tpu_custom_call.1} parent=11 // pred_fallthru
        _
      // Predicated region
      $region33: #{tpu_custom_call.1} parent=11 // pred_check
        %p267 = pneg %p169
      $region34: #{tpu_custom_call.1} parent=11 // pred_check_branch
        %269 = sbr.rel (%p267) target = $region36
      $region35: #{tpu_custom_call.1} parent=11 // pred_region
        _
      $region36: #{tpu_custom_call.1} parent=11 // pred_fallthru
        _
      // Predicated region
      $region37: #{tpu_custom_call.1} parent=11 // pred_check
        %p270 = pneg %p190
      $region38: #{tpu_custom_call.1} parent=11 // pred_check_branch
        %272 = sbr.rel (%p270) target = $region40
      $region39: #{tpu_custom_call.1} parent=11 // pred_region
        _
      $region40: #{tpu_custom_call.1} parent=11 // pred_fallthru
        _
      // Predicated region
      $region41: #{tpu_custom_call.1} parent=11 // pred_check
        %p273 = pneg %p211
      $region42: #{tpu_custom_call.1} parent=11 // pred_check_branch
        %275 = sbr.rel (%p273) target = $region44
      $region43: #{tpu_custom_call.1} parent=11 // pred_region
        _
      $region44: #{tpu_custom_call.1} parent=11 // pred_fallthru
        _
    $region12: #{tpu_custom_call.1} parent=5 // pred_fallthru
      _
    %p276 = scmp.lt.s32.totalorder %s17, 2
    // Predicated region
    $region45: #{tpu_custom_call.1} parent=5 // pred_check
      %p277 = pneg %p276
    $region46: #{tpu_custom_call.1} parent=5 // pred_check_branch
      %279 = sbr.rel (%p277) target = $region48
    $region47: #{tpu_custom_call.1} parent=5 // pred_region
      // Predicated region
      $region49: #{tpu_custom_call.1} parent=47 // pred_check
        %p280 = pneg %p37
      $region50: #{tpu_custom_call.1} parent=47 // pred_check_branch
        %282 = sbr.rel (%p280) target = $region52
      $region51: #{tpu_custom_call.1} parent=47 // pred_region
        %s283 = smul.u32 64, %s17
        %p284 = scmp.lt.s32.totalorder %s283, 127
        %s285 = scalar_select %p284, %s283, 127
        %s286 = smul.addr %s285, 4
        %s287 = scalar_lea.vmem %s0, %s286
        %s288 = smul.u32 64, %s17
      $region52: #{tpu_custom_call.1} parent=47 // pred_fallthru
        _
    $region48: #{tpu_custom_call.1} parent=5 // pred_fallthru
      _
    %p289 = scmp.le.s32.totalorder 1, %s17
    %p290 = scmp.lt.s32.totalorder %s17, 3
    %p291 = pnand %p289, %p290
    %p292 = pneg %p291
    // Predicated region
    $region53: #{tpu_custom_call.1} parent=5 // pred_check
      _
    $region54: #{tpu_custom_call.1} parent=5 // pred_check_branch
      %294 = sbr.rel (%p291) target = $region56
    $region55: #{tpu_custom_call.1} parent=5 // pred_region
      %s295 = ssub.s32 %s17, 1
      %s296 = smul.u32 64, %s22
      %p297 = scmp.lt.s32.totalorder %s296, 127
      %s298 = scalar_select %p297, %s296, 127
      %s299 = smul.addr %s298, 4
      %s300 = scalar_lea.vmem %s0, %s299
      %p301 = pneg %p43
      %p302 = pneg %p40
      %p303 = pneg %p64
      %p304 = pneg %p61
      %p305 = pneg %p85
      %p306 = pneg %p82
      %p307 = pneg %p106
      %p308 = pneg %p103
      %p309 = pneg %p127
      %p310 = pneg %p124
      %p311 = pneg %p148
      %p312 = pneg %p145
      %p313 = pneg %p169
      %p314 = pneg %p166
      %p315 = pneg %p190
      %p316 = pneg %p187
      %p317 = pneg %p211
      %p318 = pneg %p208
      %p319 = pneg %p237
      %p320 = pneg %p234
      %s321 = smul.u32 64, %s22
      %p322 = scmp.lt.s32.totalorder %s321, 127
      %s323 = scalar_select %p322, %s321, 127
      %s324 = smul.addr %s323, 8
      %s325 = scalar_lea.vmem %s9, %s324
      %s326 = smul.u32 64, %s22
      %p327 = scmp.lt.s32.totalorder %s326, 127
      %s328 = scalar_select %p327, %s326, 127
      %s329 = smul.addr %s328, 4
      %s330 = scalar_lea.vmem %s0, %s329
      %s331 = smul.u32 64, %s22
      %s332 = smul.u32 64, %s22
      %p333 = scmp.lt.s32.totalorder %s332, 127
      %s334 = scalar_select %p333, %s332, 127
      %s335 = smul.addr %s334, 8
      %s336 = scalar_lea.vmem %s9, %s335
      %s337 = smul.u32 64, %s22
      %v339 = vld [vmem:[%s330] sm:$0xf]
      %v340 = vld [vmem:[%s330 + $0x4] sm:$0xf]
      %v341 = vld [vmem:[%s330 + $0x8] sm:$0xf]
      %v342 = vld [vmem:[%s330 + $0xc] sm:$0xf]
      %v343 = vld [vmem:[%s330 + $0x10] sm:$0xf]
      %v344 = vld [vmem:[%s330 + $0x14] sm:$0xf]
      %v345 = vld [vmem:[%s330 + $0x18] sm:$0xf]
      %v346 = vld [vmem:[%s330 + $0x1c] sm:$0xf]
      %v347 = vld [vmem:[%s330 + $0x20] sm:$0xf]
      %v348 = vld [vmem:[%s330 + $0x24] sm:$0xf]
      %v349 = vld [vmem:[%s330 + $0x28] sm:$0xf]
      %v350 = vld [vmem:[%s330 + $0x2c] sm:$0xf]
      %v351 = vld [vmem:[%s330 + $0x30] sm:$0xf]
      %v352 = vld [vmem:[%s330 + $0x34] sm:$0xf]
      %v353 = vld [vmem:[%s330 + $0x38] sm:$0xf]
      %v354 = vld [vmem:[%s330 + $0x3c] sm:$0xf]
      %v355 = vld [vmem:[%s330 + $0x40] sm:$0xf]
      %v356 = vld [vmem:[%s330 + $0x44] sm:$0xf]
      %v357 = vld [vmem:[%s330 + $0x48] sm:$0xf]
      %v358 = vld [vmem:[%s330 + $0x4c] sm:$0xf]
      %v359 = vld [vmem:[%s330 + $0x50] sm:$0xf]
      %v360 = vld [vmem:[%s330 + $0x54] sm:$0xf]
      %v361 = vld [vmem:[%s330 + $0x58] sm:$0xf]
      %v362 = vld [vmem:[%s330 + $0x5c] sm:$0xf]
      %v363 = vld [vmem:[%s330 + $0x60] sm:$0xf]
      %v364 = vld [vmem:[%s330 + $0x64] sm:$0xf]
      %v365 = vld [vmem:[%s330 + $0x68] sm:$0xf]
      %v366 = vld [vmem:[%s330 + $0x6c] sm:$0xf]
      %v367 = vld [vmem:[%s330 + $0x70] sm:$0xf]
      %v368 = vld [vmem:[%s330 + $0x74] sm:$0xf]
      %v369 = vld [vmem:[%s330 + $0x78] sm:$0xf]
      %v370 = vld [vmem:[%s330 + $0x7c] sm:$0xf]
      %v371 = vld [vmem:[%s330 + $0x80] sm:$0xf]
      %v372 = vld [vmem:[%s330 + $0x84] sm:$0xf]
      %v373 = vld [vmem:[%s330 + $0x88] sm:$0xf]
      %v374 = vld [vmem:[%s330 + $0x8c] sm:$0xf]
      %v375 = vld [vmem:[%s330 + $0x90] sm:$0xf]
      %v376 = vld [vmem:[%s330 + $0x94] sm:$0xf]
      %v377 = vld [vmem:[%s330 + $0x98] sm:$0xf]
      %v378 = vld [vmem:[%s330 + $0x9c] sm:$0xf]
      %v379 = vld [vmem:[%s330 + $0xa0] sm:$0xf]
      %v380 = vld [vmem:[%s330 + $0xa4] sm:$0xf]
      %v381 = vld [vmem:[%s330 + $0xa8] sm:$0xf]
      %v382 = vld [vmem:[%s330 + $0xac] sm:$0xf]
      %v383 = vld [vmem:[%s330 + $0xb0] sm:$0xf]
      %v384 = vld [vmem:[%s330 + $0xb4] sm:$0xf]
      %v385 = vld [vmem:[%s330 + $0xb8] sm:$0xf]
      %v386 = vld [vmem:[%s330 + $0xbc] sm:$0xf]
      %v387 = vld [vmem:[%s330 + $0xc0] sm:$0xf]
      %v388 = vld [vmem:[%s330 + $0xc4] sm:$0xf]
      %v389 = vld [vmem:[%s330 + $0xc8] sm:$0xf]
      %v390 = vld [vmem:[%s330 + $0xcc] sm:$0xf]
      %v391 = vld [vmem:[%s330 + $0xd0] sm:$0xf]
      %v392 = vld [vmem:[%s330 + $0xd4] sm:$0xf]
      %v393 = vld [vmem:[%s330 + $0xd8] sm:$0xf]
      %v394 = vld [vmem:[%s330 + $0xdc] sm:$0xf]
      %v395 = vld [vmem:[%s330 + $0xe0] sm:$0xf]
      %v396 = vld [vmem:[%s330 + $0xe4] sm:$0xf]
      %v397 = vld [vmem:[%s330 + $0xe8] sm:$0xf]
      %v398 = vld [vmem:[%s330 + $0xec] sm:$0xf]
      %v399 = vld [vmem:[%s330 + $0xf0] sm:$0xf]
      %v400 = vld [vmem:[%s330 + $0xf4] sm:$0xf]
      %v401 = vld [vmem:[%s330 + $0xf8] sm:$0xf]
      %v402 = vld [vmem:[%s330 + $0xfc] sm:$0xf]
      %v403 = vld [vmem:[%s1] sm:$0xff]
      %v404 = vld [vmem:[%s1 + $0x8] sm:$0xff]
      %v405 = vld [vmem:[%s1 + $0x10] sm:$0xff]
      %v406 = vld [vmem:[%s2] sm:$0x3]
      %v408 = vlaneseq
      %v409 = vshrl.u32 %v408, 7
      %v410 = vsub.s32 0, %v409
      %v411 = vrot.slane %v406, %v410
      %v412 = vlaneseq
      %v413 = vshrl.u32 %v412, 7
      %v414 = vsub.s32 1, %v413
      %v415 = vrot.slane %v406, %v414
      %v482 = vunpack.c.l.b16 %v339
      %v483 = vunpack.c.l.b16 %v340
      %v484 = vunpack.c.l.b16 %v341
      %v485 = vunpack.c.l.b16 %v342
      %v486 = vunpack.c.l.b16 %v343
      %v487 = vunpack.c.l.b16 %v344
      %v488 = vunpack.c.l.b16 %v345
      %v489 = vunpack.c.l.b16 %v346
      %v490 = vunpack.c.l.b16 %v347
      %v491 = vunpack.c.l.b16 %v348
      %v492 = vunpack.c.l.b16 %v349
      %v493 = vunpack.c.l.b16 %v350
      %v494 = vunpack.c.l.b16 %v351
      %v495 = vunpack.c.l.b16 %v352
      %v496 = vunpack.c.l.b16 %v353
      %v497 = vunpack.c.l.b16 %v354
      %v498 = vunpack.c.l.b16 %v355
      %v499 = vunpack.c.l.b16 %v356
      %v500 = vunpack.c.l.b16 %v357
      %v501 = vunpack.c.l.b16 %v358
      %v502 = vunpack.c.l.b16 %v359
      %v503 = vunpack.c.l.b16 %v360
      %v504 = vunpack.c.l.b16 %v361
      %v505 = vunpack.c.l.b16 %v362
      %v506 = vunpack.c.l.b16 %v363
      %v507 = vunpack.c.l.b16 %v364
      %v508 = vunpack.c.l.b16 %v365
      %v509 = vunpack.c.l.b16 %v366
      %v510 = vunpack.c.l.b16 %v367
      %v511 = vunpack.c.l.b16 %v368
      %v512 = vunpack.c.l.b16 %v369
      %v513 = vunpack.c.l.b16 %v370
      %v514 = vunpack.c.l.b16 %v371
      %v515 = vunpack.c.l.b16 %v372
      %v516 = vunpack.c.l.b16 %v373
      %v517 = vunpack.c.l.b16 %v374
      %v518 = vunpack.c.l.b16 %v375
      %v519 = vunpack.c.l.b16 %v376
      %v520 = vunpack.c.l.b16 %v377
      %v521 = vunpack.c.l.b16 %v378
      %v522 = vunpack.c.l.b16 %v379
      %v523 = vunpack.c.l.b16 %v380
      %v524 = vunpack.c.l.b16 %v381
      %v525 = vunpack.c.l.b16 %v382
      %v526 = vunpack.c.l.b16 %v383
      %v527 = vunpack.c.l.b16 %v384
      %v528 = vunpack.c.l.b16 %v385
      %v529 = vunpack.c.l.b16 %v386
      %v530 = vunpack.c.l.b16 %v387
      %v531 = vunpack.c.l.b16 %v388
      %v532 = vunpack.c.l.b16 %v389
      %v533 = vunpack.c.l.b16 %v390
      %v534 = vunpack.c.l.b16 %v391
      %v535 = vunpack.c.l.b16 %v392
      %v536 = vunpack.c.l.b16 %v393
      %v537 = vunpack.c.l.b16 %v394
      %v538 = vunpack.c.l.b16 %v395
      %v539 = vunpack.c.l.b16 %v396
      %v540 = vunpack.c.l.b16 %v397
      %v541 = vunpack.c.l.b16 %v398
      %v542 = vunpack.c.l.b16 %v399
      %v543 = vunpack.c.l.b16 %v400
      %v544 = vunpack.c.l.b16 %v401
      %v545 = vunpack.c.l.b16 %v402
      %v546 = vpack.c.b16 %v483, %v482
      %v547 = vpack.c.b16 %v485, %v484
      %v548 = vpack.c.b16 %v487, %v486
      %v549 = vpack.c.b16 %v489, %v488
      %v550 = vpack.c.b16 %v491, %v490
      %v551 = vpack.c.b16 %v493, %v492
      %v552 = vpack.c.b16 %v495, %v494
      %v553 = vpack.c.b16 %v497, %v496
      %v554 = vpack.c.b16 %v499, %v498
      %v555 = vpack.c.b16 %v501, %v500
      %v556 = vpack.c.b16 %v503, %v502
      %v557 = vpack.c.b16 %v505, %v504
      %v558 = vpack.c.b16 %v507, %v506
      %v559 = vpack.c.b16 %v509, %v508
      %v560 = vpack.c.b16 %v511, %v510
      %v561 = vpack.c.b16 %v513, %v512
      %v562 = vpack.c.b16 %v515, %v514
      %v563 = vpack.c.b16 %v517, %v516
      %v564 = vpack.c.b16 %v519, %v518
      %v565 = vpack.c.b16 %v521, %v520
      %v566 = vpack.c.b16 %v523, %v522
      %v567 = vpack.c.b16 %v525, %v524
      %v568 = vpack.c.b16 %v527, %v526
      %v569 = vpack.c.b16 %v529, %v528
      %v570 = vpack.c.b16 %v531, %v530
      %v571 = vpack.c.b16 %v533, %v532
      %v572 = vpack.c.b16 %v535, %v534
      %v573 = vpack.c.b16 %v537, %v536
      %v574 = vpack.c.b16 %v539, %v538
      %v575 = vpack.c.b16 %v541, %v540
      %v576 = vpack.c.b16 %v543, %v542
      %v577 = vpack.c.b16 %v545, %v544
      %v581 = vunpack.c.l.b16 %v403
      %v582 = vunpack.c.h.b16 %v403
      %v583 = vunpack.c.l.b16 %v404
      %v584 = vunpack.c.h.b16 %v404
      %v585 = vunpack.c.l.b16 %v405
      %v586 = vunpack.c.h.b16 %v405
      %v587 = vpack.c.b16 %v583, %v581
      %v588 = vpack.c.b16 %v584, %v582
      %v589 = vpack.c.b16 %v585, %v585
      %v590 = vpack.c.b16 %v586, %v586
      %vm593 = vcmask 187392
      %v595 = vsel %vm593, %v546, 0
      %v598 = vsel %vm593, %v547, 0
      %v601 = vsel %vm593, %v548, 0
      %v604 = vsel %vm593, %v549, 0
      %v607 = vsel %vm593, %v550, 0
      %v610 = vsel %vm593, %v551, 0
      %v613 = vsel %vm593, %v552, 0
      %v616 = vsel %vm593, %v553, 0
      %v619 = vsel %vm593, %v554, 0
      %v622 = vsel %vm593, %v555, 0
      %v625 = vsel %vm593, %v556, 0
      %v628 = vsel %vm593, %v557, 0
      %v631 = vsel %vm593, %v558, 0
      %v634 = vsel %vm593, %v559, 0
      %v637 = vsel %vm593, %v560, 0
      %v640 = vsel %vm593, %v561, 0
      %v643 = vsel %vm593, %v562, 0
      %v646 = vsel %vm593, %v563, 0
      %v649 = vsel %vm593, %v564, 0
      %v652 = vsel %vm593, %v565, 0
      %v655 = vsel %vm593, %v566, 0
      %v658 = vsel %vm593, %v567, 0
      %v661 = vsel %vm593, %v568, 0
      %v664 = vsel %vm593, %v569, 0
      %v667 = vsel %vm593, %v570, 0
      %v670 = vsel %vm593, %v571, 0
      %v673 = vsel %vm593, %v572, 0
      %v676 = vsel %vm593, %v573, 0
      %v679 = vsel %vm593, %v574, 0
      %v682 = vsel %vm593, %v575, 0
      %v685 = vsel %vm593, %v576, 0
      %v688 = vsel %vm593, %v577, 0
      %vm690 = vcmask 1042432
      %vm691 = vcmask 1043456
      %v692 = vsel %vm690, 4294967295, 65535
      %v693 = vsel %vm691, %v692, 0
      %v695 = vand.u32 %v589, %v693
      %v698 = vand.u32 %v590, %v693
      %700 = vmatprep.subr.bf16.mxu0 %v588
      %701 = vmatpush1.bf16.msra.mxu0 %v587
      %702 = vmatprep.subr.bf16.mxu0 %v698
      %703 = vmatpush1.bf16.msra.mxu0 %v695
      %704 = vmatprep.subr.bf16.mxu0 0
      %705 = vmatpush1.bf16.msra.mxu0 0
      %706 = vmatprep.subr.bf16.mxu0 0
      %707 = vmatpush1.bf16.msra.mxu0 0
      %708 = vmatprep.subr.bf16.mxu0 0
      %709 = vmatpush1.bf16.msra.mxu0 0
      %710 = vmatprep.subr.bf16.mxu0 0
      %711 = vmatpush1.bf16.msra.mxu0 0
      %712 = vmatprep.subr.bf16.mxu0 0
      %713 = vmatpush1.bf16.msra.mxu0 0
      %714 = vmatprep.subr.bf16.mxu0 0
      %715 = vmatpush1.bf16.msra.mxu0 0
      %716 = vmatprep.subr.bf16.mxu0 0
      %717 = vmatpush1.bf16.msra.mxu0 0
      %718 = vmatprep.subr.bf16.mxu0 0
      %719 = vmatpush1.bf16.msra.mxu0 0
      %720 = vmatprep.subr.bf16.mxu0 0
      %721 = vmatpush1.bf16.msra.mxu0 0
      %722 = vmatprep.subr.bf16.mxu0 0
      %723 = vmatpush1.bf16.msra.mxu0 0
      %724 = vmatprep.subr.bf16.mxu0 0
      %725 = vmatpush1.bf16.msra.mxu0 0
      %726 = vmatprep.subr.bf16.mxu0 0
      %727 = vmatpush1.bf16.msra.mxu0 0
      %728 = vmatprep.subr.bf16.mxu0 0
      %729 = vmatpush1.bf16.msra.mxu0 0
      %730 = vmatprep.subr.bf16.mxu0 0
      %731 = vmatpush1.bf16.msra.mxu0 0
      %732 = vmatprep.mubr.bf16.mxu0 0
      %733 = vmatmul.mubr.bf16.gmra.mrb[0].mxu0 %v595
      %v734 = vpop.f32.mrb[0].mxu0
      %v735 = vadd.f32 %v411, %v734
      %v736 = vpop.f32.mrb[0].mxu0
      %v737 = vadd.f32 %v415, %v736
      %v738 = vpop.f32.mrb[0].mxu0
      %v739 = vadd.f32 %v411, %v738
      %v740 = vpop.f32.mrb[0].mxu0
      %v741 = vadd.f32 %v415, %v740
      %742 = vmatprep.mubr.bf16.mxu0 0
      %743 = vmatmul.mubr.bf16.gmra.mrb[0].mxu0 %v598
      %v744 = vpop.f32.mrb[0].mxu0
      %v745 = vadd.f32 %v411, %v744
      %v746 = vpop.f32.mrb[0].mxu0
      %v747 = vadd.f32 %v415, %v746
      %v748 = vpop.f32.mrb[0].mxu0
      %v749 = vadd.f32 %v411, %v748
      %v750 = vpop.f32.mrb[0].mxu0
      %v751 = vadd.f32 %v415, %v750
      %752 = vmatprep.mubr.bf16.mxu0 0
      %753 = vmatmul.mubr.bf16.gmra.mrb[0].mxu0 %v601
      %v754 = vpop.f32.mrb[0].mxu0
      %v755 = vadd.f32 %v411, %v754
      %v756 = vpop.f32.mrb[0].mxu0
      %v757 = vadd.f32 %v415, %v756
      %v758 = vpop.f32.mrb[0].mxu0
      %v759 = vadd.f32 %v411, %v758
      %v760 = vpop.f32.mrb[0].mxu0
      %v761 = vadd.f32 %v415, %v760
      %762 = vmatprep.mubr.bf16.mxu0 0
      %763 = vmatmul.mubr.bf16.gmra.mrb[0].mxu0 %v604
      %v764 = vpop.f32.mrb[0].mxu0
      %v765 = vadd.f32 %v411, %v764
      %v766 = vpop.f32.mrb[0].mxu0
      %v767 = vadd.f32 %v415, %v766
      %v768 = vpop.f32.mrb[0].mxu0
      %v769 = vadd.f32 %v411, %v768
      %v770 = vpop.f32.mrb[0].mxu0
      %v771 = vadd.f32 %v415, %v770
      %772 = vmatprep.mubr.bf16.mxu0 0
      %773 = vmatmul.mubr.bf16.gmra.mrb[0].mxu0 %v607
      %v774 = vpop.f32.mrb[0].mxu0
      %v775 = vadd.f32 %v411, %v774
      %v776 = vpop.f32.mrb[0].mxu0
      %v777 = vadd.f32 %v415, %v776
      %v778 = vpop.f32.mrb[0].mxu0
      %v779 = vadd.f32 %v411, %v778
      %v780 = vpop.f32.mrb[0].mxu0
      %v781 = vadd.f32 %v415, %v780
      %782 = vmatprep.mubr.bf16.mxu0 0
      %783 = vmatmul.mubr.bf16.gmra.mrb[0].mxu0 %v610
      %v784 = vpop.f32.mrb[0].mxu0
      %v785 = vadd.f32 %v411, %v784
      %v786 = vpop.f32.mrb[0].mxu0
      %v787 = vadd.f32 %v415, %v786
      %v788 = vpop.f32.mrb[0].mxu0
      %v789 = vadd.f32 %v411, %v788
      %v790 = vpop.f32.mrb[0].mxu0
      %v791 = vadd.f32 %v415, %v790
      %792 = vmatprep.mubr.bf16.mxu0 0
      %793 = vmatmul.mubr.bf16.gmra.mrb[0].mxu0 %v613
      %v794 = vpop.f32.mrb[0].mxu0
      %v795 = vadd.f32 %v411, %v794
      %v796 = vpop.f32.mrb[0].mxu0
      %v797 = vadd.f32 %v415, %v796
      %v798 = vpop.f32.mrb[0].mxu0
      %v799 = vadd.f32 %v411, %v798
      %v800 = vpop.f32.mrb[0].mxu0
      %v801 = vadd.f32 %v415, %v800
      %802 = vmatprep.mubr.bf16.mxu0 0
      %803 = vmatmul.mubr.bf16.gmra.mrb[0].mxu0 %v616
      %v804 = vpop.f32.mrb[0].mxu0
      %v805 = vadd.f32 %v411, %v804
      %v806 = vpop.f32.mrb[0].mxu0
      %v807 = vadd.f32 %v415, %v806
      %v808 = vpop.f32.mrb[0].mxu0
      %v809 = vadd.f32 %v411, %v808
      %v810 = vpop.f32.mrb[0].mxu0
      %v811 = vadd.f32 %v415, %v810
      %812 = vmatprep.mubr.bf16.mxu0 0
      %813 = vmatmul.mubr.bf16.gmra.mrb[0].mxu0 %v619
      %v814 = vpop.f32.mrb[0].mxu0
      %v815 = vadd.f32 %v411, %v814
      %v816 = vpop.f32.mrb[0].mxu0
      %v817 = vadd.f32 %v415, %v816
      %v818 = vpop.f32.mrb[0].mxu0
      %v819 = vadd.f32 %v411, %v818
      %v820 = vpop.f32.mrb[0].mxu0
      %v821 = vadd.f32 %v415, %v820
      %822 = vmatprep.mubr.bf16.mxu0 0
      %823 = vmatmul.mubr.bf16.gmra.mrb[0].mxu0 %v622
      %v824 = vpop.f32.mrb[0].mxu0
      %v825 = vadd.f32 %v411, %v824
      %v826 = vpop.f32.mrb[0].mxu0
      %v827 = vadd.f32 %v415, %v826
      %v828 = vpop.f32.mrb[0].mxu0
      %v829 = vadd.f32 %v411, %v828
      %v830 = vpop.f32.mrb[0].mxu0
      %v831 = vadd.f32 %v415, %v830
      %832 = vmatprep.mubr.bf16.mxu0 0
      %833 = vmatmul.mubr.bf16.gmra.mrb[0].mxu0 %v625
      %v834 = vpop.f32.mrb[0].mxu0
      %v835 = vadd.f32 %v411, %v834
      %v836 = vpop.f32.mrb[0].mxu0
      %v837 = vadd.f32 %v415, %v836
      %v838 = vpop.f32.mrb[0].mxu0
      %v839 = vadd.f32 %v411, %v838
      %v840 = vpop.f32.mrb[0].mxu0
      %v841 = vadd.f32 %v415, %v840
      %842 = vmatprep.mubr.bf16.mxu0 0
      %843 = vmatmul.mubr.bf16.gmra.mrb[0].mxu0 %v628
      %v844 = vpop.f32.mrb[0].mxu0
      %v845 = vadd.f32 %v411, %v844
      %v846 = vpop.f32.mrb[0].mxu0
      %v847 = vadd.f32 %v415, %v846
      %v848 = vpop.f32.mrb[0].mxu0
      %v849 = vadd.f32 %v411, %v848
      %v850 = vpop.f32.mrb[0].mxu0
      %v851 = vadd.f32 %v415, %v850
      %852 = vmatprep.mubr.bf16.mxu0 0
      %853 = vmatmul.mubr.bf16.gmra.mrb[0].mxu0 %v631
      %v854 = vpop.f32.mrb[0].mxu0
      %v855 = vadd.f32 %v411, %v854
      %v856 = vpop.f32.mrb[0].mxu0
      %v857 = vadd.f32 %v415, %v856
      %v858 = vpop.f32.mrb[0].mxu0
      %v859 = vadd.f32 %v411, %v858
      %v860 = vpop.f32.mrb[0].mxu0
      %v861 = vadd.f32 %v415, %v860
      %862 = vmatprep.mubr.bf16.mxu0 0
      %863 = vmatmul.mubr.bf16.gmra.mrb[0].mxu0 %v634
      %v864 = vpop.f32.mrb[0].mxu0
      %v865 = vadd.f32 %v411, %v864
      %v866 = vpop.f32.mrb[0].mxu0
      %v867 = vadd.f32 %v415, %v866
      %v868 = vpop.f32.mrb[0].mxu0
      %v869 = vadd.f32 %v411, %v868
      %v870 = vpop.f32.mrb[0].mxu0
      %v871 = vadd.f32 %v415, %v870
      %872 = vmatprep.mubr.bf16.mxu0 0
      %873 = vmatmul.mubr.bf16.gmra.mrb[0].mxu0 %v637
      %v874 = vpop.f32.mrb[0].mxu0
      %v875 = vadd.f32 %v411, %v874
      %v876 = vpop.f32.mrb[0].mxu0
      %v877 = vadd.f32 %v415, %v876
      %v878 = vpop.f32.mrb[0].mxu0
      %v879 = vadd.f32 %v411, %v878
      %v880 = vpop.f32.mrb[0].mxu0
      %v881 = vadd.f32 %v415, %v880
      %882 = vmatprep.mubr.bf16.mxu0 0
      %883 = vmatmul.mubr.bf16.gmra.mrb[0].mxu0 %v640
      %v884 = vpop.f32.mrb[0].mxu0
      %v885 = vadd.f32 %v411, %v884
      %v886 = vpop.f32.mrb[0].mxu0
      %v887 = vadd.f32 %v415, %v886
      %v888 = vpop.f32.mrb[0].mxu0
      %v889 = vadd.f32 %v411, %v888
      %v890 = vpop.f32.mrb[0].mxu0
      %v891 = vadd.f32 %v415, %v890
      %892 = vmatprep.mubr.bf16.mxu0 0
      %893 = vmatmul.mubr.bf16.gmra.mrb[0].mxu0 %v643
      %v894 = vpop.f32.mrb[0].mxu0
      %v895 = vadd.f32 %v411, %v894
      %v896 = vpop.f32.mrb[0].mxu0
      %v897 = vadd.f32 %v415, %v896
      %v898 = vpop.f32.mrb[0].mxu0
      %v899 = vadd.f32 %v411, %v898
      %v900 = vpop.f32.mrb[0].mxu0
      %v901 = vadd.f32 %v415, %v900
      %902 = vmatprep.mubr.bf16.mxu0 0
      %903 = vmatmul.mubr.bf16.gmra.mrb[0].mxu0 %v646
      %v904 = vpop.f32.mrb[0].mxu0
      %v905 = vadd.f32 %v411, %v904
      %v906 = vpop.f32.mrb[0].mxu0
      %v907 = vadd.f32 %v415, %v906
      %v908 = vpop.f32.mrb[0].mxu0
      %v909 = vadd.f32 %v411, %v908
      %v910 = vpop.f32.mrb[0].mxu0
      %v911 = vadd.f32 %v415, %v910
      %912 = vmatprep.mubr.bf16.mxu0 0
      %913 = vmatmul.mubr.bf16.gmra.mrb[0].mxu0 %v649
      %v914 = vpop.f32.mrb[0].mxu0
      %v915 = vadd.f32 %v411, %v914
      %v916 = vpop.f32.mrb[0].mxu0
      %v917 = vadd.f32 %v415, %v916
      %v918 = vpop.f32.mrb[0].mxu0
      %v919 = vadd.f32 %v411, %v918
      %v920 = vpop.f32.mrb[0].mxu0
      %v921 = vadd.f32 %v415, %v920
      %922 = vmatprep.mubr.bf16.mxu0 0
      %923 = vmatmul.mubr.bf16.gmra.mrb[0].mxu0 %v652
      %v924 = vpop.f32.mrb[0].mxu0
      %v925 = vadd.f32 %v411, %v924
      %v926 = vpop.f32.mrb[0].mxu0
      %v927 = vadd.f32 %v415, %v926
      %v928 = vpop.f32.mrb[0].mxu0
      %v929 = vadd.f32 %v411, %v928
      %v930 = vpop.f32.mrb[0].mxu0
      %v931 = vadd.f32 %v415, %v930
      %932 = vmatprep.mubr.bf16.mxu0 0
      %933 = vmatmul.mubr.bf16.gmra.mrb[0].mxu0 %v655
      %v934 = vpop.f32.mrb[0].mxu0
      %v935 = vadd.f32 %v411, %v934
      %v936 = vpop.f32.mrb[0].mxu0
      %v937 = vadd.f32 %v415, %v936
      %v938 = vpop.f32.mrb[0].mxu0
      %v939 = vadd.f32 %v411, %v938
      %v940 = vpop.f32.mrb[0].mxu0
      %v941 = vadd.f32 %v415, %v940
      %942 = vmatprep.mubr.bf16.mxu0 0
      %943 = vmatmul.mubr.bf16.gmra.mrb[0].mxu0 %v658
      %v944 = vpop.f32.mrb[0].mxu0
      %v945 = vadd.f32 %v411, %v944
      %v946 = vpop.f32.mrb[0].mxu0
      %v947 = vadd.f32 %v415, %v946
      %v948 = vpop.f32.mrb[0].mxu0
      %v949 = vadd.f32 %v411, %v948
      %v950 = vpop.f32.mrb[0].mxu0
      %v951 = vadd.f32 %v415, %v950
      %952 = vmatprep.mubr.bf16.mxu0 0
      %953 = vmatmul.mubr.bf16.gmra.mrb[0].mxu0 %v661
      %v954 = vpop.f32.mrb[0].mxu0
      %v955 = vadd.f32 %v411, %v954
      %v956 = vpop.f32.mrb[0].mxu0
      %v957 = vadd.f32 %v415, %v956
      %v958 = vpop.f32.mrb[0].mxu0
      %v959 = vadd.f32 %v411, %v958
      %v960 = vpop.f32.mrb[0].mxu0
      %v961 = vadd.f32 %v415, %v960
      %962 = vmatprep.mubr.bf16.mxu0 0
      %963 = vmatmul.mubr.bf16.gmra.mrb[0].mxu0 %v664
      %v964 = vpop.f32.mrb[0].mxu0
      %v965 = vadd.f32 %v411, %v964
      %v966 = vpop.f32.mrb[0].mxu0
      %v967 = vadd.f32 %v415, %v966
      %v968 = vpop.f32.mrb[0].mxu0
      %v969 = vadd.f32 %v411, %v968
      %v970 = vpop.f32.mrb[0].mxu0
      %v971 = vadd.f32 %v415, %v970
      %972 = vmatprep.mubr.bf16.mxu0 0
      %973 = vmatmul.mubr.bf16.gmra.mrb[0].mxu0 %v667
      %v974 = vpop.f32.mrb[0].mxu0
      %v975 = vadd.f32 %v411, %v974
      %v976 = vpop.f32.mrb[0].mxu0
      %v977 = vadd.f32 %v415, %v976
      %v978 = vpop.f32.mrb[0].mxu0
      %v979 = vadd.f32 %v411, %v978
      %v980 = vpop.f32.mrb[0].mxu0
      %v981 = vadd.f32 %v415, %v980
      %982 = vmatprep.mubr.bf16.mxu0 0
      %983 = vmatmul.mubr.bf16.gmra.mrb[0].mxu0 %v670
      %v984 = vpop.f32.mrb[0].mxu0
      %v985 = vadd.f32 %v411, %v984
      %v986 = vpop.f32.mrb[0].mxu0
      %v987 = vadd.f32 %v415, %v986
      %v988 = vpop.f32.mrb[0].mxu0
      %v989 = vadd.f32 %v411, %v988
      %v990 = vpop.f32.mrb[0].mxu0
      %v991 = vadd.f32 %v415, %v990
      %992 = vmatprep.mubr.bf16.mxu0 0
      %993 = vmatmul.mubr.bf16.gmra.mrb[0].mxu0 %v673
      %v994 = vpop.f32.mrb[0].mxu0
      %v995 = vadd.f32 %v411, %v994
      %v996 = vpop.f32.mrb[0].mxu0
      %v997 = vadd.f32 %v415, %v996
      %v998 = vpop.f32.mrb[0].mxu0
      %v999 = vadd.f32 %v411, %v998
      %v1000 = vpop.f32.mrb[0].mxu0
      %v1001 = vadd.f32 %v415, %v1000
      %1002 = vmatprep.mubr.bf16.mxu0 0
      %1003 = vmatmul.mubr.bf16.gmra.mrb[0].mxu0 %v676
      %v1004 = vpop.f32.mrb[0].mxu0
      %v1005 = vadd.f32 %v411, %v1004
      %v1006 = vpop.f32.mrb[0].mxu0
      %v1007 = vadd.f32 %v415, %v1006
      %v1008 = vpop.f32.mrb[0].mxu0
      %v1009 = vadd.f32 %v411, %v1008
      %v1010 = vpop.f32.mrb[0].mxu0
      %v1011 = vadd.f32 %v415, %v1010
      %1012 = vmatprep.mubr.bf16.mxu0 0
      %1013 = vmatmul.mubr.bf16.gmra.mrb[0].mxu0 %v679
      %v1014 = vpop.f32.mrb[0].mxu0
      %v1015 = vadd.f32 %v411, %v1014
      %v1016 = vpop.f32.mrb[0].mxu0
      %v1017 = vadd.f32 %v415, %v1016
      %v1018 = vpop.f32.mrb[0].mxu0
      %v1019 = vadd.f32 %v411, %v1018
      %v1020 = vpop.f32.mrb[0].mxu0
      %v1021 = vadd.f32 %v415, %v1020
      %1022 = vmatprep.mubr.bf16.mxu0 0
      %1023 = vmatmul.mubr.bf16.gmra.mrb[0].mxu0 %v682
      %v1024 = vpop.f32.mrb[0].mxu0
      %v1025 = vadd.f32 %v411, %v1024
      %v1026 = vpop.f32.mrb[0].mxu0
      %v1027 = vadd.f32 %v415, %v1026
      %v1028 = vpop.f32.mrb[0].mxu0
      %v1029 = vadd.f32 %v411, %v1028
      %v1030 = vpop.f32.mrb[0].mxu0
      %v1031 = vadd.f32 %v415, %v1030
      %1032 = vmatprep.mubr.bf16.mxu0 0
      %1033 = vmatmul.mubr.bf16.gmra.mrb[0].mxu0 %v685
      %v1034 = vpop.f32.mrb[0].mxu0
      %v1035 = vadd.f32 %v411, %v1034
      %v1036 = vpop.f32.mrb[0].mxu0
      %v1037 = vadd.f32 %v415, %v1036
      %v1038 = vpop.f32.mrb[0].mxu0
      %v1039 = vadd.f32 %v411, %v1038
      %v1040 = vpop.f32.mrb[0].mxu0
      %v1041 = vadd.f32 %v415, %v1040
      %1042 = vmatprep.mubr.bf16.mxu0 0
      %1043 = vmatmul.mubr.bf16.gmra.mrb[0].mxu0 %v688
      %v1044 = vpop.f32.mrb[0].mxu0
      %v1045 = vadd.f32 %v411, %v1044
      %v1046 = vpop.f32.mrb[0].mxu0
      %v1047 = vadd.f32 %v415, %v1046
      %v1048 = vpop.f32.mrb[0].mxu0
      %v1049 = vadd.f32 %v411, %v1048
      %v1050 = vpop.f32.mrb[0].mxu0
      %v1051 = vadd.f32 %v415, %v1050
      %1052 = vdwg.mxu0
      %v1053 = vmax.f32 %v735, 0.0
      %v1054 = vmax.f32 %v737, 0.0
      %v1055 = vmax.f32 %v739, 0.0
      %v1056 = vmax.f32 %v741, 0.0
      %v1057 = vmax.f32 %v745, 0.0
      %v1058 = vmax.f32 %v747, 0.0
      %v1059 = vmax.f32 %v749, 0.0
      %v1060 = vmax.f32 %v751, 0.0
      %v1061 = vmax.f32 %v755, 0.0
      %v1062 = vmax.f32 %v757, 0.0
      %v1063 = vmax.f32 %v759, 0.0
      %v1064 = vmax.f32 %v761, 0.0
      %v1065 = vmax.f32 %v765, 0.0
      %v1066 = vmax.f32 %v767, 0.0
      %v1067 = vmax.f32 %v769, 0.0
      %v1068 = vmax.f32 %v771, 0.0
      %v1069 = vmax.f32 %v775, 0.0
      %v1070 = vmax.f32 %v777, 0.0
      %v1071 = vmax.f32 %v779, 0.0
      %v1072 = vmax.f32 %v781, 0.0
      %v1073 = vmax.f32 %v785, 0.0
      %v1074 = vmax.f32 %v787, 0.0
      %v1075 = vmax.f32 %v789, 0.0
      %v1076 = vmax.f32 %v791, 0.0
      %v1077 = vmax.f32 %v795, 0.0
      %v1078 = vmax.f32 %v797, 0.0
      %v1079 = vmax.f32 %v799, 0.0
      %v1080 = vmax.f32 %v801, 0.0
      %v1081 = vmax.f32 %v805, 0.0
      %v1082 = vmax.f32 %v807, 0.0
      %v1083 = vmax.f32 %v809, 0.0
      %v1084 = vmax.f32 %v811, 0.0
      %v1085 = vmax.f32 %v815, 0.0
      %v1086 = vmax.f32 %v817, 0.0
      %v1087 = vmax.f32 %v819, 0.0
      %v1088 = vmax.f32 %v821, 0.0
      %v1089 = vmax.f32 %v825, 0.0
      %v1090 = vmax.f32 %v827, 0.0
      %v1091 = vmax.f32 %v829, 0.0
      %v1092 = vmax.f32 %v831, 0.0
      %v1093 = vmax.f32 %v835, 0.0
      %v1094 = vmax.f32 %v837, 0.0
      %v1095 = vmax.f32 %v839, 0.0
      %v1096 = vmax.f32 %v841, 0.0
      %v1097 = vmax.f32 %v845, 0.0
      %v1098 = vmax.f32 %v847, 0.0
      %v1099 = vmax.f32 %v849, 0.0
      %v1100 = vmax.f32 %v851, 0.0
      %v1101 = vmax.f32 %v855, 0.0
      %v1102 = vmax.f32 %v857, 0.0
      %v1103 = vmax.f32 %v859, 0.0
      %v1104 = vmax.f32 %v861, 0.0
      %v1105 = vmax.f32 %v865, 0.0
      %v1106 = vmax.f32 %v867, 0.0
      %v1107 = vmax.f32 %v869, 0.0
      %v1108 = vmax.f32 %v871, 0.0
      %v1109 = vmax.f32 %v875, 0.0
      %v1110 = vmax.f32 %v877, 0.0
      %v1111 = vmax.f32 %v879, 0.0
      %v1112 = vmax.f32 %v881, 0.0
      %v1113 = vmax.f32 %v885, 0.0
      %v1114 = vmax.f32 %v887, 0.0
      %v1115 = vmax.f32 %v889, 0.0
      %v1116 = vmax.f32 %v891, 0.0
      %v1117 = vmax.f32 %v895, 0.0
      %v1118 = vmax.f32 %v897, 0.0
      %v1119 = vmax.f32 %v899, 0.0
      %v1120 = vmax.f32 %v901, 0.0
      %v1121 = vmax.f32 %v905, 0.0
      %v1122 = vmax.f32 %v907, 0.0
      %v1123 = vmax.f32 %v909, 0.0
      %v1124 = vmax.f32 %v911, 0.0
      %v1125 = vmax.f32 %v915, 0.0
      %v1126 = vmax.f32 %v917, 0.0
      %v1127 = vmax.f32 %v919, 0.0
      %v1128 = vmax.f32 %v921, 0.0
      %v1129 = vmax.f32 %v925, 0.0
      %v1130 = vmax.f32 %v927, 0.0
      %v1131 = vmax.f32 %v929, 0.0
      %v1132 = vmax.f32 %v931, 0.0
      %v1133 = vmax.f32 %v935, 0.0
      %v1134 = vmax.f32 %v937, 0.0
      %v1135 = vmax.f32 %v939, 0.0
      %v1136 = vmax.f32 %v941, 0.0
      %v1137 = vmax.f32 %v945, 0.0
      %v1138 = vmax.f32 %v947, 0.0
      %v1139 = vmax.f32 %v949, 0.0
      %v1140 = vmax.f32 %v951, 0.0
      %v1141 = vmax.f32 %v955, 0.0
      %v1142 = vmax.f32 %v957, 0.0
      %v1143 = vmax.f32 %v959, 0.0
      %v1144 = vmax.f32 %v961, 0.0
      %v1145 = vmax.f32 %v965, 0.0
      %v1146 = vmax.f32 %v967, 0.0
      %v1147 = vmax.f32 %v969, 0.0
      %v1148 = vmax.f32 %v971, 0.0
      %v1149 = vmax.f32 %v975, 0.0
      %v1150 = vmax.f32 %v977, 0.0
      %v1151 = vmax.f32 %v979, 0.0
      %v1152 = vmax.f32 %v981, 0.0
      %v1153 = vmax.f32 %v985, 0.0
      %v1154 = vmax.f32 %v987, 0.0
      %v1155 = vmax.f32 %v989, 0.0
      %v1156 = vmax.f32 %v991, 0.0
      %v1157 = vmax.f32 %v995, 0.0
      %v1158 = vmax.f32 %v997, 0.0
      %v1159 = vmax.f32 %v999, 0.0
      %v1160 = vmax.f32 %v1001, 0.0
      %v1161 = vmax.f32 %v1005, 0.0
      %v1162 = vmax.f32 %v1007, 0.0
      %v1163 = vmax.f32 %v1009, 0.0
      %v1164 = vmax.f32 %v1011, 0.0
      %v1165 = vmax.f32 %v1015, 0.0
      %v1166 = vmax.f32 %v1017, 0.0
      %v1167 = vmax.f32 %v1019, 0.0
      %v1168 = vmax.f32 %v1021, 0.0
      %v1169 = vmax.f32 %v1025, 0.0
      %v1170 = vmax.f32 %v1027, 0.0
      %v1171 = vmax.f32 %v1029, 0.0
      %v1172 = vmax.f32 %v1031, 0.0
      %v1173 = vmax.f32 %v1035, 0.0
      %v1174 = vmax.f32 %v1037, 0.0
      %v1175 = vmax.f32 %v1039, 0.0
      %v1176 = vmax.f32 %v1041, 0.0
      %v1177 = vmax.f32 %v1045, 0.0
      %v1178 = vmax.f32 %v1047, 0.0
      %v1179 = vmax.f32 %v1049, 0.0
      %v1180 = vmax.f32 %v1051, 0.0
      %v1181 = vpack.c.bf16 %v1055, %v1053
      %v1182 = vpack.c.bf16 %v1059, %v1057
      %v1183 = vpack.c.bf16 %v1063, %v1061
      %v1184 = vpack.c.bf16 %v1067, %v1065
      %v1185 = vpack.c.bf16 %v1071, %v1069
      %v1186 = vpack.c.bf16 %v1075, %v1073
      %v1187 = vpack.c.bf16 %v1079, %v1077
      %v1188 = vpack.c.bf16 %v1083, %v1081
      %v1189 = vpack.c.bf16 %v1087, %v1085
      %v1190 = vpack.c.bf16 %v1091, %v1089
      %v1191 = vpack.c.bf16 %v1095, %v1093
      %v1192 = vpack.c.bf16 %v1099, %v1097
      %v1193 = vpack.c.bf16 %v1103, %v1101
      %v1194 = vpack.c.bf16 %v1107, %v1105
      %v1195 = vpack.c.bf16 %v1111, %v1109
      %v1196 = vpack.c.bf16 %v1115, %v1113
      %v1197 = vpack.c.bf16 %v1119, %v1117
      %v1198 = vpack.c.bf16 %v1123, %v1121
      %v1199 = vpack.c.bf16 %v1127, %v1125
      %v1200 = vpack.c.bf16 %v1131, %v1129
      %v1201 = vpack.c.bf16 %v1135, %v1133
      %v1202 = vpack.c.bf16 %v1139, %v1137
      %v1203 = vpack.c.bf16 %v1143, %v1141
      %v1204 = vpack.c.bf16 %v1147, %v1145
      %v1205 = vpack.c.bf16 %v1151, %v1149
      %v1206 = vpack.c.bf16 %v1155, %v1153
      %v1207 = vpack.c.bf16 %v1159, %v1157
      %v1208 = vpack.c.bf16 %v1163, %v1161
      %v1209 = vpack.c.bf16 %v1167, %v1165
      %v1210 = vpack.c.bf16 %v1171, %v1169
      %v1211 = vpack.c.bf16 %v1175, %v1173
      %v1212 = vpack.c.bf16 %v1179, %v1177
      %v1213 = vpack.c.bf16 %v1056, %v1054
      %v1214 = vpack.c.bf16 %v1060, %v1058
      %v1215 = vpack.c.bf16 %v1064, %v1062
      %v1216 = vpack.c.bf16 %v1068, %v1066
      %v1217 = vpack.c.bf16 %v1072, %v1070
      %v1218 = vpack.c.bf16 %v1076, %v1074
      %v1219 = vpack.c.bf16 %v1080, %v1078
      %v1220 = vpack.c.bf16 %v1084, %v1082
      %v1221 = vpack.c.bf16 %v1088, %v1086
      %v1222 = vpack.c.bf16 %v1092, %v1090
      %v1223 = vpack.c.bf16 %v1096, %v1094
      %v1224 = vpack.c.bf16 %v1100, %v1098
      %v1225 = vpack.c.bf16 %v1104, %v1102
      %v1226 = vpack.c.bf16 %v1108, %v1106
      %v1227 = vpack.c.bf16 %v1112, %v1110
      %v1228 = vpack.c.bf16 %v1116, %v1114
      %v1229 = vpack.c.bf16 %v1120, %v1118
      %v1230 = vpack.c.bf16 %v1124, %v1122
      %v1231 = vpack.c.bf16 %v1128, %v1126
      %v1232 = vpack.c.bf16 %v1132, %v1130
      %v1233 = vpack.c.bf16 %v1136, %v1134
      %v1234 = vpack.c.bf16 %v1140, %v1138
      %v1235 = vpack.c.bf16 %v1144, %v1142
      %v1236 = vpack.c.bf16 %v1148, %v1146
      %v1237 = vpack.c.bf16 %v1152, %v1150
      %v1238 = vpack.c.bf16 %v1156, %v1154
      %v1239 = vpack.c.bf16 %v1160, %v1158
      %v1240 = vpack.c.bf16 %v1164, %v1162
      %v1241 = vpack.c.bf16 %v1168, %v1166
      %v1242 = vpack.c.bf16 %v1172, %v1170
      %v1243 = vpack.c.bf16 %v1176, %v1174
      %v1244 = vpack.c.bf16 %v1180, %v1178
      %v1245 = vld [vmem:[%s3] sm:$0xf]
      %v1246 = vld [vmem:[%s3 + $0x4] sm:$0xf]
      %v1247 = vld [vmem:[%s3 + $0x8] sm:$0xf]
      %v1248 = vld [vmem:[%s3 + $0xc] sm:$0xf]
      %v1249 = vld [vmem:[%s3 + $0x10] sm:$0xf]
      %v1250 = vld [vmem:[%s3 + $0x14] sm:$0xf]
      %v1251 = vld [vmem:[%s3 + $0x18] sm:$0xf]
      %v1252 = vld [vmem:[%s3 + $0x1c] sm:$0xf]
      %v1253 = vld [vmem:[%s3 + $0x20] sm:$0xf]
      %v1254 = vld [vmem:[%s3 + $0x24] sm:$0xf]
      %v1255 = vld [vmem:[%s3 + $0x28] sm:$0xf]
      %v1256 = vld [vmem:[%s3 + $0x2c] sm:$0xf]
      %v1257 = vld [vmem:[%s3 + $0x30] sm:$0xf]
      %v1258 = vld [vmem:[%s3 + $0x34] sm:$0xf]
      %v1259 = vld [vmem:[%s3 + $0x38] sm:$0xf]
      %v1260 = vld [vmem:[%s3 + $0x3c] sm:$0xf]
      %v1261 = vld [vmem:[%s4] sm:$0x1]
      %v1263 = vlaneseq
      %v1264 = vshrl.u32 %v1263, 7
      %v1265 = vsub.s32 0, %v1264
      %v1266 = vrot.slane %v1261, %v1265
      %v1284 = vunpack.c.l.b16 %v1245
      %v1285 = vunpack.c.l.b16 %v1246
      %v1286 = vunpack.c.l.b16 %v1247
      %v1287 = vunpack.c.l.b16 %v1248
      %v1288 = vunpack.c.l.b16 %v1249
      %v1289 = vunpack.c.l.b16 %v1250
      %v1290 = vunpack.c.l.b16 %v1251
      %v1291 = vunpack.c.l.b16 %v1252
      %v1292 = vunpack.c.l.b16 %v1253
      %v1293 = vunpack.c.l.b16 %v1254
      %v1294 = vunpack.c.l.b16 %v1255
      %v1295 = vunpack.c.l.b16 %v1256
      %v1296 = vunpack.c.l.b16 %v1257
      %v1297 = vunpack.c.l.b16 %v1258
      %v1298 = vunpack.c.l.b16 %v1259
      %v1299 = vunpack.c.l.b16 %v1260
      %v1300 = vpack.c.b16 %v1285, %v1284
      %v1301 = vpack.c.b16 %v1287, %v1286
      %v1302 = vpack.c.b16 %v1289, %v1288
      %v1303 = vpack.c.b16 %v1291, %v1290
      %v1304 = vpack.c.b16 %v1293, %v1292
      %v1305 = vpack.c.b16 %v1295, %v1294
      %v1306 = vpack.c.b16 %v1297, %v1296
      %v1307 = vpack.c.b16 %v1299, %v1298
      %1316 = vmatprep.subr.bf16.mxu0 0
      %1317 = vmatpush1.bf16.msra.mxu0 %v1300
      %1318 = vmatprep.subr.bf16.mxu0 0
      %1319 = vmatpush1.bf16.msra.mxu0 %v1301
      %1320 = vmatprep.subr.bf16.mxu0 0
      %1321 = vmatpush1.bf16.msra.mxu0 %v1302
      %1322 = vmatprep.subr.bf16.mxu0 0
      %1323 = vmatpush1.bf16.msra.mxu0 %v1303
      %1324 = vmatprep.subr.bf16.mxu0 0
      %1325 = vmatpush1.bf16.msra.mxu0 %v1304
      %1326 = vmatprep.subr.bf16.mxu0 0
      %1327 = vmatpush1.bf16.msra.mxu0 %v1305
      %1328 = vmatprep.subr.bf16.mxu0 0
      %1329 = vmatpush1.bf16.msra.mxu0 %v1306
      %1330 = vmatprep.subr.bf16.mxu0 0
      %1331 = vmatpush1.bf16.msra.mxu0 %v1307
      %1332 = vmatprep.subr.bf16.mxu0 0
      %1333 = vmatpush1.bf16.msra.mxu0 0
      %1334 = vmatprep.subr.bf16.mxu0 0
      %1335 = vmatpush1.bf16.msra.mxu0 0
      %1336 = vmatprep.subr.bf16.mxu0 0
      %1337 = vmatpush1.bf16.msra.mxu0 0
      %1338 = vmatprep.subr.bf16.mxu0 0
      %1339 = vmatpush1.bf16.msra.mxu0 0
      %1340 = vmatprep.subr.bf16.mxu0 0
      %1341 = vmatpush1.bf16.msra.mxu0 0
      %1342 = vmatprep.subr.bf16.mxu0 0
      %1343 = vmatpush1.bf16.msra.mxu0 0
      %1344 = vmatprep.subr.bf16.mxu0 0
      %1345 = vmatpush1.bf16.msra.mxu0 0
      %1346 = vmatprep.subr.bf16.mxu0 0
      %1347 = vmatpush1.bf16.msra.mxu0 0
      %1348 = vmatprep.mubr.bf16.mxu0 0
      %1349 = vmatmul.mubr.bf16.gmra.mrb[0].mxu0 %v1181
      %v1350 = vpop.f32.mrb[0].mxu0
      %v1351 = vadd.f32 %v1266, %v1350
      %v1352 = vpop.f32.mrb[0].mxu0
      %v1353 = vpop.f32.mrb[0].mxu0
      %v1354 = vadd.f32 %v1266, %v1353
      %v1355 = vpop.f32.mrb[0].mxu0
      %1356 = vmatprep.mubr.bf16.mxu0 0
      %1357 = vmatmul.mubr.bf16.gmra.mrb[0].mxu0 %v1182
      %v1358 = vpop.f32.mrb[0].mxu0
      %v1359 = vadd.f32 %v1266, %v1358
      %v1360 = vpop.f32.mrb[0].mxu0
      %v1361 = vpop.f32.mrb[0].mxu0
      %v1362 = vadd.f32 %v1266, %v1361
      %v1363 = vpop.f32.mrb[0].mxu0
      %1364 = vmatprep.mubr.bf16.mxu0 0
      %1365 = vmatmul.mubr.bf16.gmra.mrb[0].mxu0 %v1183
      %v1366 = vpop.f32.mrb[0].mxu0
      %v1367 = vadd.f32 %v1266, %v1366
      %v1368 = vpop.f32.mrb[0].mxu0
      %v1369 = vpop.f32.mrb[0].mxu0
      %v1370 = vadd.f32 %v1266, %v1369
      %v1371 = vpop.f32.mrb[0].mxu0
      %1372 = vmatprep.mubr.bf16.mxu0 0
      %1373 = vmatmul.mubr.bf16.gmra.mrb[0].mxu0 %v1184
      %v1374 = vpop.f32.mrb[0].mxu0
      %v1375 = vadd.f32 %v1266, %v1374
      %v1376 = vpop.f32.mrb[0].mxu0
      %v1377 = vpop.f32.mrb[0].mxu0
      %v1378 = vadd.f32 %v1266, %v1377
      %v1379 = vpop.f32.mrb[0].mxu0
      %1380 = vmatprep.mubr.bf16.mxu0 0
      %1381 = vmatmul.mubr.bf16.gmra.mrb[0].mxu0 %v1185
      %v1382 = vpop.f32.mrb[0].mxu0
      %v1383 = vadd.f32 %v1266, %v1382
      %v1384 = vpop.f32.mrb[0].mxu0
      %v1385 = vpop.f32.mrb[0].mxu0
      %v1386 = vadd.f32 %v1266, %v1385
      %v1387 = vpop.f32.mrb[0].mxu0
      %1388 = vmatprep.mubr.bf16.mxu0 0
      %1389 = vmatmul.mubr.bf16.gmra.mrb[0].mxu0 %v1186
      %v1390 = vpop.f32.mrb[0].mxu0
      %v1391 = vadd.f32 %v1266, %v1390
      %v1392 = vpop.f32.mrb[0].mxu0
      %v1393 = vpop.f32.mrb[0].mxu0
      %v1394 = vadd.f32 %v1266, %v1393
      %v1395 = vpop.f32.mrb[0].mxu0
      %1396 = vmatprep.mubr.bf16.mxu0 0
      %1397 = vmatmul.mubr.bf16.gmra.mrb[0].mxu0 %v1187
      %v1398 = vpop.f32.mrb[0].mxu0
      %v1399 = vadd.f32 %v1266, %v1398
      %v1400 = vpop.f32.mrb[0].mxu0
      %v1401 = vpop.f32.mrb[0].mxu0
      %v1402 = vadd.f32 %v1266, %v1401
      %v1403 = vpop.f32.mrb[0].mxu0
      %1404 = vmatprep.mubr.bf16.mxu0 0
      %1405 = vmatmul.mubr.bf16.gmra.mrb[0].mxu0 %v1188
      %v1406 = vpop.f32.mrb[0].mxu0
      %v1407 = vadd.f32 %v1266, %v1406
      %v1408 = vpop.f32.mrb[0].mxu0
      %v1409 = vpop.f32.mrb[0].mxu0
      %v1410 = vadd.f32 %v1266, %v1409
      %v1411 = vpop.f32.mrb[0].mxu0
      %1412 = vmatprep.mubr.bf16.mxu0 0
      %1413 = vmatmul.mubr.bf16.gmra.mrb[0].mxu0 %v1189
      %v1414 = vpop.f32.mrb[0].mxu0
      %v1415 = vadd.f32 %v1266, %v1414
      %v1416 = vpop.f32.mrb[0].mxu0
      %v1417 = vpop.f32.mrb[0].mxu0
      %v1418 = vadd.f32 %v1266, %v1417
      %v1419 = vpop.f32.mrb[0].mxu0
      %1420 = vmatprep.mubr.bf16.mxu0 0
      %1421 = vmatmul.mubr.bf16.gmra.mrb[0].mxu0 %v1190
      %v1422 = vpop.f32.mrb[0].mxu0
      %v1423 = vadd.f32 %v1266, %v1422
      %v1424 = vpop.f32.mrb[0].mxu0
      %v1425 = vpop.f32.mrb[0].mxu0
      %v1426 = vadd.f32 %v1266, %v1425
      %v1427 = vpop.f32.mrb[0].mxu0
      %1428 = vmatprep.mubr.bf16.mxu0 0
      %1429 = vmatmul.mubr.bf16.gmra.mrb[0].mxu0 %v1191
      %v1430 = vpop.f32.mrb[0].mxu0
      %v1431 = vadd.f32 %v1266, %v1430
      %v1432 = vpop.f32.mrb[0].mxu0
      %v1433 = vpop.f32.mrb[0].mxu0
      %v1434 = vadd.f32 %v1266, %v1433
      %v1435 = vpop.f32.mrb[0].mxu0
      %1436 = vmatprep.mubr.bf16.mxu0 0
      %1437 = vmatmul.mubr.bf16.gmra.mrb[0].mxu0 %v1192
      %v1438 = vpop.f32.mrb[0].mxu0
      %v1439 = vadd.f32 %v1266, %v1438
      %v1440 = vpop.f32.mrb[0].mxu0
      %v1441 = vpop.f32.mrb[0].mxu0
      %v1442 = vadd.f32 %v1266, %v1441
      %v1443 = vpop.f32.mrb[0].mxu0
      %1444 = vmatprep.mubr.bf16.mxu0 0
      %1445 = vmatmul.mubr.bf16.gmra.mrb[0].mxu0 %v1193
      %v1446 = vpop.f32.mrb[0].mxu0
      %v1447 = vadd.f32 %v1266, %v1446
      %v1448 = vpop.f32.mrb[0].mxu0
      %v1449 = vpop.f32.mrb[0].mxu0
      %v1450 = vadd.f32 %v1266, %v1449
      %v1451 = vpop.f32.mrb[0].mxu0
      %1452 = vmatprep.mubr.bf16.mxu0 0
      %1453 = vmatmul.mubr.bf16.gmra.mrb[0].mxu0 %v1194
      %v1454 = vpop.f32.mrb[0].mxu0
      %v1455 = vadd.f32 %v1266, %v1454
      %v1456 = vpop.f32.mrb[0].mxu0
      %v1457 = vpop.f32.mrb[0].mxu0
      %v1458 = vadd.f32 %v1266, %v1457
      %v1459 = vpop.f32.mrb[0].mxu0
      %1460 = vmatprep.mubr.bf16.mxu0 0
      %1461 = vmatmul.mubr.bf16.gmra.mrb[0].mxu0 %v1195
      %v1462 = vpop.f32.mrb[0].mxu0
      %v1463 = vadd.f32 %v1266, %v1462
      %v1464 = vpop.f32.mrb[0].mxu0
      %v1465 = vpop.f32.mrb[0].mxu0
      %v1466 = vadd.f32 %v1266, %v1465
      %v1467 = vpop.f32.mrb[0].mxu0
      %1468 = vmatprep.mubr.bf16.mxu0 0
      %1469 = vmatmul.mubr.bf16.gmra.mrb[0].mxu0 %v1196
      %v1470 = vpop.f32.mrb[0].mxu0
      %v1471 = vadd.f32 %v1266, %v1470
      %v1472 = vpop.f32.mrb[0].mxu0
      %v1473 = vpop.f32.mrb[0].mxu0
      %v1474 = vadd.f32 %v1266, %v1473
      %v1475 = vpop.f32.mrb[0].mxu0
      %1476 = vmatprep.mubr.bf16.mxu0 0
      %1477 = vmatmul.mubr.bf16.gmra.mrb[0].mxu0 %v1197
      %v1478 = vpop.f32.mrb[0].mxu0
      %v1479 = vadd.f32 %v1266, %v1478
      %v1480 = vpop.f32.mrb[0].mxu0
      %v1481 = vpop.f32.mrb[0].mxu0
      %v1482 = vadd.f32 %v1266, %v1481
      %v1483 = vpop.f32.mrb[0].mxu0
      %1484 = vmatprep.mubr.bf16.mxu0 0
      %1485 = vmatmul.mubr.bf16.gmra.mrb[0].mxu0 %v1198
      %v1486 = vpop.f32.mrb[0].mxu0
      %v1487 = vadd.f32 %v1266, %v1486
      %v1488 = vpop.f32.mrb[0].mxu0
      %v1489 = vpop.f32.mrb[0].mxu0
      %v1490 = vadd.f32 %v1266, %v1489
      %v1491 = vpop.f32.mrb[0].mxu0
      %1492 = vmatprep.mubr.bf16.mxu0 0
      %1493 = vmatmul.mubr.bf16.gmra.mrb[0].mxu0 %v1199
      %v1494 = vpop.f32.mrb[0].mxu0
      %v1495 = vadd.f32 %v1266, %v1494
      %v1496 = vpop.f32.mrb[0].mxu0
      %v1497 = vpop.f32.mrb[0].mxu0
      %v1498 = vadd.f32 %v1266, %v1497
      %v1499 = vpop.f32.mrb[0].mxu0
      %1500 = vmatprep.mubr.bf16.mxu0 0
      %1501 = vmatmul.mubr.bf16.gmra.mrb[0].mxu0 %v1200
      %v1502 = vpop.f32.mrb[0].mxu0
      %v1503 = vadd.f32 %v1266, %v1502
      %v1504 = vpop.f32.mrb[0].mxu0
      %v1505 = vpop.f32.mrb[0].mxu0
      %v1506 = vadd.f32 %v1266, %v1505
      %v1507 = vpop.f32.mrb[0].mxu0
      %1508 = vmatprep.mubr.bf16.mxu0 0
      %1509 = vmatmul.mubr.bf16.gmra.mrb[0].mxu0 %v1201
      %v1510 = vpop.f32.mrb[0].mxu0
      %v1511 = vadd.f32 %v1266, %v1510
      %v1512 = vpop.f32.mrb[0].mxu0
      %v1513 = vpop.f32.mrb[0].mxu0
      %v1514 = vadd.f32 %v1266, %v1513
      %v1515 = vpop.f32.mrb[0].mxu0
      %1516 = vmatprep.mubr.bf16.mxu0 0
      %1517 = vmatmul.mubr.bf16.gmra.mrb[0].mxu0 %v1202
      %v1518 = vpop.f32.mrb[0].mxu0
      %v1519 = vadd.f32 %v1266, %v1518
      %v1520 = vpop.f32.mrb[0].mxu0
      %v1521 = vpop.f32.mrb[0].mxu0
      %v1522 = vadd.f32 %v1266, %v1521
      %v1523 = vpop.f32.mrb[0].mxu0
      %1524 = vmatprep.mubr.bf16.mxu0 0
      %1525 = vmatmul.mubr.bf16.gmra.mrb[0].mxu0 %v1203
      %v1526 = vpop.f32.mrb[0].mxu0
      %v1527 = vadd.f32 %v1266, %v1526
      %v1528 = vpop.f32.mrb[0].mxu0
      %v1529 = vpop.f32.mrb[0].mxu0
      %v1530 = vadd.f32 %v1266, %v1529
      %v1531 = vpop.f32.mrb[0].mxu0
      %1532 = vmatprep.mubr.bf16.mxu0 0
      %1533 = vmatmul.mubr.bf16.gmra.mrb[0].mxu0 %v1204
      %v1534 = vpop.f32.mrb[0].mxu0
      %v1535 = vadd.f32 %v1266, %v1534
      %v1536 = vpop.f32.mrb[0].mxu0
      %v1537 = vpop.f32.mrb[0].mxu0
      %v1538 = vadd.f32 %v1266, %v1537
      %v1539 = vpop.f32.mrb[0].mxu0
      %1540 = vmatprep.mubr.bf16.mxu0 0
      %1541 = vmatmul.mubr.bf16.gmra.mrb[0].mxu0 %v1205
      %v1542 = vpop.f32.mrb[0].mxu0
      %v1543 = vadd.f32 %v1266, %v1542
      %v1544 = vpop.f32.mrb[0].mxu0
      %v1545 = vpop.f32.mrb[0].mxu0
      %v1546 = vadd.f32 %v1266, %v1545
      %v1547 = vpop.f32.mrb[0].mxu0
      %1548 = vmatprep.mubr.bf16.mxu0 0
      %1549 = vmatmul.mubr.bf16.gmra.mrb[0].mxu0 %v1206
      %v1550 = vpop.f32.mrb[0].mxu0
      %v1551 = vadd.f32 %v1266, %v1550
      %v1552 = vpop.f32.mrb[0].mxu0
      %v1553 = vpop.f32.mrb[0].mxu0
      %v1554 = vadd.f32 %v1266, %v1553
      %v1555 = vpop.f32.mrb[0].mxu0
      %1556 = vmatprep.mubr.bf16.mxu0 0
      %1557 = vmatmul.mubr.bf16.gmra.mrb[0].mxu0 %v1207
      %v1558 = vpop.f32.mrb[0].mxu0
      %v1559 = vadd.f32 %v1266, %v1558
      %v1560 = vpop.f32.mrb[0].mxu0
      %v1561 = vpop.f32.mrb[0].mxu0
      %v1562 = vadd.f32 %v1266, %v1561
      %v1563 = vpop.f32.mrb[0].mxu0
      %1564 = vmatprep.mubr.bf16.mxu0 0
      %1565 = vmatmul.mubr.bf16.gmra.mrb[0].mxu0 %v1208
      %v1566 = vpop.f32.mrb[0].mxu0
      %v1567 = vadd.f32 %v1266, %v1566
      %v1568 = vpop.f32.mrb[0].mxu0
      %v1569 = vpop.f32.mrb[0].mxu0
      %v1570 = vadd.f32 %v1266, %v1569
      %v1571 = vpop.f32.mrb[0].mxu0
      %1572 = vmatprep.mubr.bf16.mxu0 0
      %1573 = vmatmul.mubr.bf16.gmra.mrb[0].mxu0 %v1209
      %v1574 = vpop.f32.mrb[0].mxu0
      %v1575 = vadd.f32 %v1266, %v1574
      %v1576 = vpop.f32.mrb[0].mxu0
      %v1577 = vpop.f32.mrb[0].mxu0
      %v1578 = vadd.f32 %v1266, %v1577
      %v1579 = vpop.f32.mrb[0].mxu0
      %1580 = vmatprep.mubr.bf16.mxu0 0
      %1581 = vmatmul.mubr.bf16.gmra.mrb[0].mxu0 %v1210
      %v1582 = vpop.f32.mrb[0].mxu0
      %v1583 = vadd.f32 %v1266, %v1582
      %v1584 = vpop.f32.mrb[0].mxu0
      %v1585 = vpop.f32.mrb[0].mxu0
      %v1586 = vadd.f32 %v1266, %v1585
      %v1587 = vpop.f32.mrb[0].mxu0
      %1588 = vmatprep.mubr.bf16.mxu0 0
      %1589 = vmatmul.mubr.bf16.gmra.mrb[0].mxu0 %v1211
      %v1590 = vpop.f32.mrb[0].mxu0
      %v1591 = vadd.f32 %v1266, %v1590
      %v1592 = vpop.f32.mrb[0].mxu0
      %v1593 = vpop.f32.mrb[0].mxu0
      %v1594 = vadd.f32 %v1266, %v1593
      %v1595 = vpop.f32.mrb[0].mxu0
      %1596 = vmatprep.mubr.bf16.mxu0 0
      %1597 = vmatmul.mubr.bf16.gmra.mrb[0].mxu0 %v1212
      %v1598 = vpop.f32.mrb[0].mxu0
      %v1599 = vadd.f32 %v1266, %v1598
      %v1600 = vpop.f32.mrb[0].mxu0
      %v1601 = vpop.f32.mrb[0].mxu0
      %v1602 = vadd.f32 %v1266, %v1601
      %v1603 = vpop.f32.mrb[0].mxu0
      %1604 = vdwg.mxu0
      %v1605 = vmax.f32 %v1351, 0.0
      %v1606 = vmax.f32 %v1354, 0.0
      %v1607 = vmax.f32 %v1359, 0.0
      %v1608 = vmax.f32 %v1362, 0.0
      %v1609 = vmax.f32 %v1367, 0.0
      %v1610 = vmax.f32 %v1370, 0.0
      %v1611 = vmax.f32 %v1375, 0.0
      %v1612 = vmax.f32 %v1378, 0.0
      %v1613 = vmax.f32 %v1383, 0.0
      %v1614 = vmax.f32 %v1386, 0.0
      %v1615 = vmax.f32 %v1391, 0.0
      %v1616 = vmax.f32 %v1394, 0.0
      %v1617 = vmax.f32 %v1399, 0.0
      %v1618 = vmax.f32 %v1402, 0.0
      %v1619 = vmax.f32 %v1407, 0.0
      %v1620 = vmax.f32 %v1410, 0.0
      %v1621 = vmax.f32 %v1415, 0.0
      %v1622 = vmax.f32 %v1418, 0.0
      %v1623 = vmax.f32 %v1423, 0.0
      %v1624 = vmax.f32 %v1426, 0.0
      %v1625 = vmax.f32 %v1431, 0.0
      %v1626 = vmax.f32 %v1434, 0.0
      %v1627 = vmax.f32 %v1439, 0.0
      %v1628 = vmax.f32 %v1442, 0.0
      %v1629 = vmax.f32 %v1447, 0.0
      %v1630 = vmax.f32 %v1450, 0.0
      %v1631 = vmax.f32 %v1455, 0.0
      %v1632 = vmax.f32 %v1458, 0.0
      %v1633 = vmax.f32 %v1463, 0.0
      %v1634 = vmax.f32 %v1466, 0.0
      %v1635 = vmax.f32 %v1471, 0.0
      %v1636 = vmax.f32 %v1474, 0.0
      %v1637 = vmax.f32 %v1479, 0.0
      %v1638 = vmax.f32 %v1482, 0.0
      %v1639 = vmax.f32 %v1487, 0.0
      %v1640 = vmax.f32 %v1490, 0.0
      %v1641 = vmax.f32 %v1495, 0.0
      %v1642 = vmax.f32 %v1498, 0.0
      %v1643 = vmax.f32 %v1503, 0.0
      %v1644 = vmax.f32 %v1506, 0.0
      %v1645 = vmax.f32 %v1511, 0.0
      %v1646 = vmax.f32 %v1514, 0.0
      %v1647 = vmax.f32 %v1519, 0.0
      %v1648 = vmax.f32 %v1522, 0.0
      %v1649 = vmax.f32 %v1527, 0.0
      %v1650 = vmax.f32 %v1530, 0.0
      %v1651 = vmax.f32 %v1535, 0.0
      %v1652 = vmax.f32 %v1538, 0.0
      %v1653 = vmax.f32 %v1543, 0.0
      %v1654 = vmax.f32 %v1546, 0.0
      %v1655 = vmax.f32 %v1551, 0.0
      %v1656 = vmax.f32 %v1554, 0.0
      %v1657 = vmax.f32 %v1559, 0.0
      %v1658 = vmax.f32 %v1562, 0.0
      %v1659 = vmax.f32 %v1567, 0.0
      %v1660 = vmax.f32 %v1570, 0.0
      %v1661 = vmax.f32 %v1575, 0.0
      %v1662 = vmax.f32 %v1578, 0.0
      %v1663 = vmax.f32 %v1583, 0.0
      %v1664 = vmax.f32 %v1586, 0.0
      %v1665 = vmax.f32 %v1591, 0.0
      %v1666 = vmax.f32 %v1594, 0.0
      %v1667 = vmax.f32 %v1599, 0.0
      %v1668 = vmax.f32 %v1602, 0.0
      %v1669 = vpack.c.bf16 %v1606, %v1605
      %v1670 = vpack.c.bf16 %v1608, %v1607
      %v1671 = vpack.c.bf16 %v1610, %v1609
      %v1672 = vpack.c.bf16 %v1612, %v1611
      %v1673 = vpack.c.bf16 %v1614, %v1613
      %v1674 = vpack.c.bf16 %v1616, %v1615
      %v1675 = vpack.c.bf16 %v1618, %v1617
      %v1676 = vpack.c.bf16 %v1620, %v1619
      %v1677 = vpack.c.bf16 %v1622, %v1621
      %v1678 = vpack.c.bf16 %v1624, %v1623
      %v1679 = vpack.c.bf16 %v1626, %v1625
      %v1680 = vpack.c.bf16 %v1628, %v1627
      %v1681 = vpack.c.bf16 %v1630, %v1629
      %v1682 = vpack.c.bf16 %v1632, %v1631
      %v1683 = vpack.c.bf16 %v1634, %v1633
      %v1684 = vpack.c.bf16 %v1636, %v1635
      %v1685 = vpack.c.bf16 %v1638, %v1637
      %v1686 = vpack.c.bf16 %v1640, %v1639
      %v1687 = vpack.c.bf16 %v1642, %v1641
      %v1688 = vpack.c.bf16 %v1644, %v1643
      %v1689 = vpack.c.bf16 %v1646, %v1645
      %v1690 = vpack.c.bf16 %v1648, %v1647
      %v1691 = vpack.c.bf16 %v1650, %v1649
      %v1692 = vpack.c.bf16 %v1652, %v1651
      %v1693 = vpack.c.bf16 %v1654, %v1653
      %v1694 = vpack.c.bf16 %v1656, %v1655
      %v1695 = vpack.c.bf16 %v1658, %v1657
      %v1696 = vpack.c.bf16 %v1660, %v1659
      %v1697 = vpack.c.bf16 %v1662, %v1661
      %v1698 = vpack.c.bf16 %v1664, %v1663
      %v1699 = vpack.c.bf16 %v1666, %v1665
      %v1700 = vpack.c.bf16 %v1668, %v1667
      %v1701 = vld [vmem:[%s5] sm:$0xf]
      %v1702 = vld [vmem:[%s5 + $0x4] sm:$0xf]
      %v1703 = vld [vmem:[%s5 + $0x8] sm:$0xf]
      %v1704 = vld [vmem:[%s5 + $0xc] sm:$0xf]
      %v1705 = vld [vmem:[%s5 + $0x10] sm:$0xf]
      %v1706 = vld [vmem:[%s5 + $0x14] sm:$0xf]
      %v1707 = vld [vmem:[%s5 + $0x18] sm:$0xf]
      %v1708 = vld [vmem:[%s5 + $0x1c] sm:$0xf]
      %v1709 = vld [vmem:[%s5 + $0x20] sm:$0xf]
      %v1710 = vld [vmem:[%s5 + $0x24] sm:$0xf]
      %v1711 = vld [vmem:[%s5 + $0x28] sm:$0xf]
      %v1712 = vld [vmem:[%s5 + $0x2c] sm:$0xf]
      %v1713 = vld [vmem:[%s5 + $0x30] sm:$0xf]
      %v1714 = vld [vmem:[%s5 + $0x34] sm:$0xf]
      %v1715 = vld [vmem:[%s5 + $0x38] sm:$0xf]
      %v1716 = vld [vmem:[%s5 + $0x3c] sm:$0xf]
      %v1717 = vld [vmem:[%s5 + $0x40] sm:$0xf]
      %v1718 = vld [vmem:[%s5 + $0x44] sm:$0xf]
      %v1719 = vld [vmem:[%s5 + $0x48] sm:$0xf]
      %v1720 = vld [vmem:[%s5 + $0x4c] sm:$0xf]
      %v1721 = vld [vmem:[%s5 + $0x50] sm:$0xf]
      %v1722 = vld [vmem:[%s5 + $0x54] sm:$0xf]
      %v1723 = vld [vmem:[%s5 + $0x58] sm:$0xf]
      %v1724 = vld [vmem:[%s5 + $0x5c] sm:$0xf]
      %v1725 = vld [vmem:[%s5 + $0x60] sm:$0xf]
      %v1726 = vld [vmem:[%s5 + $0x64] sm:$0xf]
      %v1727 = vld [vmem:[%s5 + $0x68] sm:$0xf]
      %v1728 = vld [vmem:[%s5 + $0x6c] sm:$0xf]
      %v1729 = vld [vmem:[%s5 + $0x70] sm:$0xf]
      %v1730 = vld [vmem:[%s5 + $0x74] sm:$0xf]
      %v1731 = vld [vmem:[%s5 + $0x78] sm:$0xf]
      %v1732 = vld [vmem:[%s5 + $0x7c] sm:$0xf]
      %v1733 = vld [vmem:[%s6] sm:$0x1]
      %v1735 = vlaneseq
      %v1736 = vshrl.u32 %v1735, 7
      %v1737 = vsub.s32 0, %v1736
      %v1738 = vrot.slane %v1733, %v1737
      %v1772 = vunpack.c.l.b16 %v1701
      %v1773 = vunpack.c.l.b16 %v1702
      %v1774 = vunpack.c.l.b16 %v1703
      %v1775 = vunpack.c.l.b16 %v1704
      %v1776 = vunpack.c.l.b16 %v1705
      %v1777 = vunpack.c.l.b16 %v1706
      %v1778 = vunpack.c.l.b16 %v1707
      %v1779 = vunpack.c.l.b16 %v1708
      %v1780 = vunpack.c.l.b16 %v1709
      %v1781 = vunpack.c.l.b16 %v1710
      %v1782 = vunpack.c.l.b16 %v1711
      %v1783 = vunpack.c.l.b16 %v1712
      %v1784 = vunpack.c.l.b16 %v1713
      %v1785 = vunpack.c.l.b16 %v1714
      %v1786 = vunpack.c.l.b16 %v1715
      %v1787 = vunpack.c.l.b16 %v1716
      %v1788 = vunpack.c.l.b16 %v1717
      %v1789 = vunpack.c.l.b16 %v1718
      %v1790 = vunpack.c.l.b16 %v1719
      %v1791 = vunpack.c.l.b16 %v1720
      %v1792 = vunpack.c.l.b16 %v1721
      %v1793 = vunpack.c.l.b16 %v1722
      %v1794 = vunpack.c.l.b16 %v1723
      %v1795 = vunpack.c.l.b16 %v1724
      %v1796 = vunpack.c.l.b16 %v1725
      %v1797 = vunpack.c.l.b16 %v1726
      %v1798 = vunpack.c.l.b16 %v1727
      %v1799 = vunpack.c.l.b16 %v1728
      %v1800 = vunpack.c.l.b16 %v1729
      %v1801 = vunpack.c.l.b16 %v1730
      %v1802 = vunpack.c.l.b16 %v1731
      %v1803 = vunpack.c.l.b16 %v1732
      %v1804 = vpack.c.b16 %v1773, %v1772
      %v1805 = vpack.c.b16 %v1775, %v1774
      %v1806 = vpack.c.b16 %v1777, %v1776
      %v1807 = vpack.c.b16 %v1779, %v1778
      %v1808 = vpack.c.b16 %v1781, %v1780
      %v1809 = vpack.c.b16 %v1783, %v1782
      %v1810 = vpack.c.b16 %v1785, %v1784
      %v1811 = vpack.c.b16 %v1787, %v1786
      %v1812 = vpack.c.b16 %v1789, %v1788
      %v1813 = vpack.c.b16 %v1791, %v1790
      %v1814 = vpack.c.b16 %v1793, %v1792
      %v1815 = vpack.c.b16 %v1795, %v1794
      %v1816 = vpack.c.b16 %v1797, %v1796
      %v1817 = vpack.c.b16 %v1799, %v1798
      %v1818 = vpack.c.b16 %v1801, %v1800
      %v1819 = vpack.c.b16 %v1803, %v1802
      %1836 = vmatprep.subr.bf16.mxu0 0
      %1837 = vmatpush1.bf16.msra.mxu0 %v1804
      %1838 = vmatprep.subr.bf16.mxu0 0
      %1839 = vmatpush1.bf16.msra.mxu0 %v1805
      %1840 = vmatprep.subr.bf16.mxu0 0
      %1841 = vmatpush1.bf16.msra.mxu0 %v1806
      %1842 = vmatprep.subr.bf16.mxu0 0
      %1843 = vmatpush1.bf16.msra.mxu0 %v1807
      %1844 = vmatprep.subr.bf16.mxu0 0
      %1845 = vmatpush1.bf16.msra.mxu0 %v1808
      %1846 = vmatprep.subr.bf16.mxu0 0
      %1847 = vmatpush1.bf16.msra.mxu0 %v1809
      %1848 = vmatprep.subr.bf16.mxu0 0
      %1849 = vmatpush1.bf16.msra.mxu0 %v1810
      %1850 = vmatprep.subr.bf16.mxu0 0
      %1851 = vmatpush1.bf16.msra.mxu0 %v1811
      %1852 = vmatprep.subr.bf16.mxu0 0
      %1853 = vmatpush1.bf16.msra.mxu0 %v1812
      %1854 = vmatprep.subr.bf16.mxu0 0
      %1855 = vmatpush1.bf16.msra.mxu0 %v1813
      %1856 = vmatprep.subr.bf16.mxu0 0
      %1857 = vmatpush1.bf16.msra.mxu0 %v1814
      %1858 = vmatprep.subr.bf16.mxu0 0
      %1859 = vmatpush1.bf16.msra.mxu0 %v1815
      %1860 = vmatprep.subr.bf16.mxu0 0
      %1861 = vmatpush1.bf16.msra.mxu0 %v1816
      %1862 = vmatprep.subr.bf16.mxu0 0
      %1863 = vmatpush1.bf16.msra.mxu0 %v1817
      %1864 = vmatprep.subr.bf16.mxu0 0
      %1865 = vmatpush1.bf16.msra.mxu0 %v1818
      %1866 = vmatprep.subr.bf16.mxu0 0
      %1867 = vmatpush1.bf16.msra.mxu0 %v1819
      %1868 = vmatprep.mubr.bf16.mxu0 %v1213
      %1869 = vmatmul.mubr.bf16.gmra.mrb[0].mxu0 %v1669
      %v1870 = vpop.f32.mrb[0].mxu0
      %v1871 = vadd.f32 %v1738, %v1870
      %v1872 = vpop.f32.mrb[0].mxu0
      %v1873 = vpop.f32.mrb[0].mxu0
      %v1874 = vadd.f32 %v1738, %v1873
      %v1875 = vpop.f32.mrb[0].mxu0
      %1876 = vmatprep.mubr.bf16.mxu0 %v1214
      %1877 = vmatmul.mubr.bf16.gmra.mrb[0].mxu0 %v1670
      %v1878 = vpop.f32.mrb[0].mxu0
      %v1879 = vadd.f32 %v1738, %v1878
      %v1880 = vpop.f32.mrb[0].mxu0
      %v1881 = vpop.f32.mrb[0].mxu0
      %v1882 = vadd.f32 %v1738, %v1881
      %v1883 = vpop.f32.mrb[0].mxu0
      %1884 = vmatprep.mubr.bf16.mxu0 %v1215
      %1885 = vmatmul.mubr.bf16.gmra.mrb[0].mxu0 %v1671
      %v1886 = vpop.f32.mrb[0].mxu0
      %v1887 = vadd.f32 %v1738, %v1886
      %v1888 = vpop.f32.mrb[0].mxu0
      %v1889 = vpop.f32.mrb[0].mxu0
      %v1890 = vadd.f32 %v1738, %v1889
      %v1891 = vpop.f32.mrb[0].mxu0
      %1892 = vmatprep.mubr.bf16.mxu0 %v1216
      %1893 = vmatmul.mubr.bf16.gmra.mrb[0].mxu0 %v1672
      %v1894 = vpop.f32.mrb[0].mxu0
      %v1895 = vadd.f32 %v1738, %v1894
      %v1896 = vpop.f32.mrb[0].mxu0
      %v1897 = vpop.f32.mrb[0].mxu0
      %v1898 = vadd.f32 %v1738, %v1897
      %v1899 = vpop.f32.mrb[0].mxu0
      %1900 = vmatprep.mubr.bf16.mxu0 %v1217
      %1901 = vmatmul.mubr.bf16.gmra.mrb[0].mxu0 %v1673
      %v1902 = vpop.f32.mrb[0].mxu0
      %v1903 = vadd.f32 %v1738, %v1902
      %v1904 = vpop.f32.mrb[0].mxu0
      %v1905 = vpop.f32.mrb[0].mxu0
      %v1906 = vadd.f32 %v1738, %v1905
      %v1907 = vpop.f32.mrb[0].mxu0
      %1908 = vmatprep.mubr.bf16.mxu0 %v1218
      %1909 = vmatmul.mubr.bf16.gmra.mrb[0].mxu0 %v1674
      %v1910 = vpop.f32.mrb[0].mxu0
      %v1911 = vadd.f32 %v1738, %v1910
      %v1912 = vpop.f32.mrb[0].mxu0
      %v1913 = vpop.f32.mrb[0].mxu0
      %v1914 = vadd.f32 %v1738, %v1913
      %v1915 = vpop.f32.mrb[0].mxu0
      %1916 = vmatprep.mubr.bf16.mxu0 %v1219
      %1917 = vmatmul.mubr.bf16.gmra.mrb[0].mxu0 %v1675
      %v1918 = vpop.f32.mrb[0].mxu0
      %v1919 = vadd.f32 %v1738, %v1918
      %v1920 = vpop.f32.mrb[0].mxu0
      %v1921 = vpop.f32.mrb[0].mxu0
      %v1922 = vadd.f32 %v1738, %v1921
      %v1923 = vpop.f32.mrb[0].mxu0
      %1924 = vmatprep.mubr.bf16.mxu0 %v1220
      %1925 = vmatmul.mubr.bf16.gmra.mrb[0].mxu0 %v1676
      %v1926 = vpop.f32.mrb[0].mxu0
      %v1927 = vadd.f32 %v1738, %v1926
      %v1928 = vpop.f32.mrb[0].mxu0
      %v1929 = vpop.f32.mrb[0].mxu0
      %v1930 = vadd.f32 %v1738, %v1929
      %v1931 = vpop.f32.mrb[0].mxu0
      %1932 = vmatprep.mubr.bf16.mxu0 %v1221
      %1933 = vmatmul.mubr.bf16.gmra.mrb[0].mxu0 %v1677
      %v1934 = vpop.f32.mrb[0].mxu0
      %v1935 = vadd.f32 %v1738, %v1934
      %v1936 = vpop.f32.mrb[0].mxu0
      %v1937 = vpop.f32.mrb[0].mxu0
      %v1938 = vadd.f32 %v1738, %v1937
      %v1939 = vpop.f32.mrb[0].mxu0
      %1940 = vmatprep.mubr.bf16.mxu0 %v1222
      %1941 = vmatmul.mubr.bf16.gmra.mrb[0].mxu0 %v1678
      %v1942 = vpop.f32.mrb[0].mxu0
      %v1943 = vadd.f32 %v1738, %v1942
      %v1944 = vpop.f32.mrb[0].mxu0
      %v1945 = vpop.f32.mrb[0].mxu0
      %v1946 = vadd.f32 %v1738, %v1945
      %v1947 = vpop.f32.mrb[0].mxu0
      %1948 = vmatprep.mubr.bf16.mxu0 %v1223
      %1949 = vmatmul.mubr.bf16.gmra.mrb[0].mxu0 %v1679
      %v1950 = vpop.f32.mrb[0].mxu0
      %v1951 = vadd.f32 %v1738, %v1950
      %v1952 = vpop.f32.mrb[0].mxu0
      %v1953 = vpop.f32.mrb[0].mxu0
      %v1954 = vadd.f32 %v1738, %v1953
      %v1955 = vpop.f32.mrb[0].mxu0
      %1956 = vmatprep.mubr.bf16.mxu0 %v1224
      %1957 = vmatmul.mubr.bf16.gmra.mrb[0].mxu0 %v1680
      %v1958 = vpop.f32.mrb[0].mxu0
      %v1959 = vadd.f32 %v1738, %v1958
      %v1960 = vpop.f32.mrb[0].mxu0
      %v1961 = vpop.f32.mrb[0].mxu0
      %v1962 = vadd.f32 %v1738, %v1961
      %v1963 = vpop.f32.mrb[0].mxu0
      %1964 = vmatprep.mubr.bf16.mxu0 %v1225
      %1965 = vmatmul.mubr.bf16.gmra.mrb[0].mxu0 %v1681
      %v1966 = vpop.f32.mrb[0].mxu0
      %v1967 = vadd.f32 %v1738, %v1966
      %v1968 = vpop.f32.mrb[0].mxu0
      %v1969 = vpop.f32.mrb[0].mxu0
      %v1970 = vadd.f32 %v1738, %v1969
      %v1971 = vpop.f32.mrb[0].mxu0
      %1972 = vmatprep.mubr.bf16.mxu0 %v1226
      %1973 = vmatmul.mubr.bf16.gmra.mrb[0].mxu0 %v1682
      %v1974 = vpop.f32.mrb[0].mxu0
      %v1975 = vadd.f32 %v1738, %v1974
      %v1976 = vpop.f32.mrb[0].mxu0
      %v1977 = vpop.f32.mrb[0].mxu0
      %v1978 = vadd.f32 %v1738, %v1977
      %v1979 = vpop.f32.mrb[0].mxu0
      %1980 = vmatprep.mubr.bf16.mxu0 %v1227
      %1981 = vmatmul.mubr.bf16.gmra.mrb[0].mxu0 %v1683
      %v1982 = vpop.f32.mrb[0].mxu0
      %v1983 = vadd.f32 %v1738, %v1982
      %v1984 = vpop.f32.mrb[0].mxu0
      %v1985 = vpop.f32.mrb[0].mxu0
      %v1986 = vadd.f32 %v1738, %v1985
      %v1987 = vpop.f32.mrb[0].mxu0
      %1988 = vmatprep.mubr.bf16.mxu0 %v1228
      %1989 = vmatmul.mubr.bf16.gmra.mrb[0].mxu0 %v1684
      %v1990 = vpop.f32.mrb[0].mxu0
      %v1991 = vadd.f32 %v1738, %v1990
      %v1992 = vpop.f32.mrb[0].mxu0
      %v1993 = vpop.f32.mrb[0].mxu0
      %v1994 = vadd.f32 %v1738, %v1993
      %v1995 = vpop.f32.mrb[0].mxu0
      %1996 = vmatprep.mubr.bf16.mxu0 %v1229
      %1997 = vmatmul.mubr.bf16.gmra.mrb[0].mxu0 %v1685
      %v1998 = vpop.f32.mrb[0].mxu0
      %v1999 = vadd.f32 %v1738, %v1998
      %v2000 = vpop.f32.mrb[0].mxu0
      %v2001 = vpop.f32.mrb[0].mxu0
      %v2002 = vadd.f32 %v1738, %v2001
      %v2003 = vpop.f32.mrb[0].mxu0
      %2004 = vmatprep.mubr.bf16.mxu0 %v1230
      %2005 = vmatmul.mubr.bf16.gmra.mrb[0].mxu0 %v1686
      %v2006 = vpop.f32.mrb[0].mxu0
      %v2007 = vadd.f32 %v1738, %v2006
      %v2008 = vpop.f32.mrb[0].mxu0
      %v2009 = vpop.f32.mrb[0].mxu0
      %v2010 = vadd.f32 %v1738, %v2009
      %v2011 = vpop.f32.mrb[0].mxu0
      %2012 = vmatprep.mubr.bf16.mxu0 %v1231
      %2013 = vmatmul.mubr.bf16.gmra.mrb[0].mxu0 %v1687
      %v2014 = vpop.f32.mrb[0].mxu0
      %v2015 = vadd.f32 %v1738, %v2014
      %v2016 = vpop.f32.mrb[0].mxu0
      %v2017 = vpop.f32.mrb[0].mxu0
      %v2018 = vadd.f32 %v1738, %v2017
      %v2019 = vpop.f32.mrb[0].mxu0
      %2020 = vmatprep.mubr.bf16.mxu0 %v1232
      %2021 = vmatmul.mubr.bf16.gmra.mrb[0].mxu0 %v1688
      %v2022 = vpop.f32.mrb[0].mxu0
      %v2023 = vadd.f32 %v1738, %v2022
      %v2024 = vpop.f32.mrb[0].mxu0
      %v2025 = vpop.f32.mrb[0].mxu0
      %v2026 = vadd.f32 %v1738, %v2025
      %v2027 = vpop.f32.mrb[0].mxu0
      %2028 = vmatprep.mubr.bf16.mxu0 %v1233
      %2029 = vmatmul.mubr.bf16.gmra.mrb[0].mxu0 %v1689
      %v2030 = vpop.f32.mrb[0].mxu0
      %v2031 = vadd.f32 %v1738, %v2030
      %v2032 = vpop.f32.mrb[0].mxu0
      %v2033 = vpop.f32.mrb[0].mxu0
      %v2034 = vadd.f32 %v1738, %v2033
      %v2035 = vpop.f32.mrb[0].mxu0
      %2036 = vmatprep.mubr.bf16.mxu0 %v1234
      %2037 = vmatmul.mubr.bf16.gmra.mrb[0].mxu0 %v1690
      %v2038 = vpop.f32.mrb[0].mxu0
      %v2039 = vadd.f32 %v1738, %v2038
      %v2040 = vpop.f32.mrb[0].mxu0
      %v2041 = vpop.f32.mrb[0].mxu0
      %v2042 = vadd.f32 %v1738, %v2041
      %v2043 = vpop.f32.mrb[0].mxu0
      %2044 = vmatprep.mubr.bf16.mxu0 %v1235
      %2045 = vmatmul.mubr.bf16.gmra.mrb[0].mxu0 %v1691
      %v2046 = vpop.f32.mrb[0].mxu0
      %v2047 = vadd.f32 %v1738, %v2046
      %v2048 = vpop.f32.mrb[0].mxu0
      %v2049 = vpop.f32.mrb[0].mxu0
      %v2050 = vadd.f32 %v1738, %v2049
      %v2051 = vpop.f32.mrb[0].mxu0
      %2052 = vmatprep.mubr.bf16.mxu0 %v1236
      %2053 = vmatmul.mubr.bf16.gmra.mrb[0].mxu0 %v1692
      %v2054 = vpop.f32.mrb[0].mxu0
      %v2055 = vadd.f32 %v1738, %v2054
      %v2056 = vpop.f32.mrb[0].mxu0
      %v2057 = vpop.f32.mrb[0].mxu0
      %v2058 = vadd.f32 %v1738, %v2057
      %v2059 = vpop.f32.mrb[0].mxu0
      %2060 = vmatprep.mubr.bf16.mxu0 %v1237
      %2061 = vmatmul.mubr.bf16.gmra.mrb[0].mxu0 %v1693
      %v2062 = vpop.f32.mrb[0].mxu0
      %v2063 = vadd.f32 %v1738, %v2062
      %v2064 = vpop.f32.mrb[0].mxu0
      %v2065 = vpop.f32.mrb[0].mxu0
      %v2066 = vadd.f32 %v1738, %v2065
      %v2067 = vpop.f32.mrb[0].mxu0
      %2068 = vmatprep.mubr.bf16.mxu0 %v1238
      %2069 = vmatmul.mubr.bf16.gmra.mrb[0].mxu0 %v1694
      %v2070 = vpop.f32.mrb[0].mxu0
      %v2071 = vadd.f32 %v1738, %v2070
      %v2072 = vpop.f32.mrb[0].mxu0
      %v2073 = vpop.f32.mrb[0].mxu0
      %v2074 = vadd.f32 %v1738, %v2073
      %v2075 = vpop.f32.mrb[0].mxu0
      %2076 = vmatprep.mubr.bf16.mxu0 %v1239
      %2077 = vmatmul.mubr.bf16.gmra.mrb[0].mxu0 %v1695
      %v2078 = vpop.f32.mrb[0].mxu0
      %v2079 = vadd.f32 %v1738, %v2078
      %v2080 = vpop.f32.mrb[0].mxu0
      %v2081 = vpop.f32.mrb[0].mxu0
      %v2082 = vadd.f32 %v1738, %v2081
      %v2083 = vpop.f32.mrb[0].mxu0
      %2084 = vmatprep.mubr.bf16.mxu0 %v1240
      %2085 = vmatmul.mubr.bf16.gmra.mrb[0].mxu0 %v1696
      %v2086 = vpop.f32.mrb[0].mxu0
      %v2087 = vadd.f32 %v1738, %v2086
      %v2088 = vpop.f32.mrb[0].mxu0
      %v2089 = vpop.f32.mrb[0].mxu0
      %v2090 = vadd.f32 %v1738, %v2089
      %v2091 = vpop.f32.mrb[0].mxu0
      %2092 = vmatprep.mubr.bf16.mxu0 %v1241
      %2093 = vmatmul.mubr.bf16.gmra.mrb[0].mxu0 %v1697
      %v2094 = vpop.f32.mrb[0].mxu0
      %v2095 = vadd.f32 %v1738, %v2094
      %v2096 = vpop.f32.mrb[0].mxu0
      %v2097 = vpop.f32.mrb[0].mxu0
      %v2098 = vadd.f32 %v1738, %v2097
      %v2099 = vpop.f32.mrb[0].mxu0
      %2100 = vmatprep.mubr.bf16.mxu0 %v1242
      %2101 = vmatmul.mubr.bf16.gmra.mrb[0].mxu0 %v1698
      %v2102 = vpop.f32.mrb[0].mxu0
      %v2103 = vadd.f32 %v1738, %v2102
      %v2104 = vpop.f32.mrb[0].mxu0
      %v2105 = vpop.f32.mrb[0].mxu0
      %v2106 = vadd.f32 %v1738, %v2105
      %v2107 = vpop.f32.mrb[0].mxu0
      %2108 = vmatprep.mubr.bf16.mxu0 %v1243
      %2109 = vmatmul.mubr.bf16.gmra.mrb[0].mxu0 %v1699
      %v2110 = vpop.f32.mrb[0].mxu0
      %v2111 = vadd.f32 %v1738, %v2110
      %v2112 = vpop.f32.mrb[0].mxu0
      %v2113 = vpop.f32.mrb[0].mxu0
      %v2114 = vadd.f32 %v1738, %v2113
      %v2115 = vpop.f32.mrb[0].mxu0
      %2116 = vmatprep.mubr.bf16.mxu0 %v1244
      %2117 = vmatmul.mubr.bf16.gmra.mrb[0].mxu0 %v1700
      %v2118 = vpop.f32.mrb[0].mxu0
      %v2119 = vadd.f32 %v1738, %v2118
      %v2120 = vpop.f32.mrb[0].mxu0
      %v2121 = vpop.f32.mrb[0].mxu0
      %v2122 = vadd.f32 %v1738, %v2121
      %v2123 = vpop.f32.mrb[0].mxu0
      %2124 = vdwg.mxu0
      %v2125 = vmax.f32 %v1871, 0.0
      %v2126 = vmax.f32 %v1874, 0.0
      %v2127 = vmax.f32 %v1879, 0.0
      %v2128 = vmax.f32 %v1882, 0.0
      %v2129 = vmax.f32 %v1887, 0.0
      %v2130 = vmax.f32 %v1890, 0.0
      %v2131 = vmax.f32 %v1895, 0.0
      %v2132 = vmax.f32 %v1898, 0.0
      %v2133 = vmax.f32 %v1903, 0.0
      %v2134 = vmax.f32 %v1906, 0.0
      %v2135 = vmax.f32 %v1911, 0.0
      %v2136 = vmax.f32 %v1914, 0.0
      %v2137 = vmax.f32 %v1919, 0.0
      %v2138 = vmax.f32 %v1922, 0.0
      %v2139 = vmax.f32 %v1927, 0.0
      %v2140 = vmax.f32 %v1930, 0.0
      %v2141 = vmax.f32 %v1935, 0.0
      %v2142 = vmax.f32 %v1938, 0.0
      %v2143 = vmax.f32 %v1943, 0.0
      %v2144 = vmax.f32 %v1946, 0.0
      %v2145 = vmax.f32 %v1951, 0.0
      %v2146 = vmax.f32 %v1954, 0.0
      %v2147 = vmax.f32 %v1959, 0.0
      %v2148 = vmax.f32 %v1962, 0.0
      %v2149 = vmax.f32 %v1967, 0.0
      %v2150 = vmax.f32 %v1970, 0.0
      %v2151 = vmax.f32 %v1975, 0.0
      %v2152 = vmax.f32 %v1978, 0.0
      %v2153 = vmax.f32 %v1983, 0.0
      %v2154 = vmax.f32 %v1986, 0.0
      %v2155 = vmax.f32 %v1991, 0.0
      %v2156 = vmax.f32 %v1994, 0.0
      %v2157 = vmax.f32 %v1999, 0.0
      %v2158 = vmax.f32 %v2002, 0.0
      %v2159 = vmax.f32 %v2007, 0.0
      %v2160 = vmax.f32 %v2010, 0.0
      %v2161 = vmax.f32 %v2015, 0.0
      %v2162 = vmax.f32 %v2018, 0.0
      %v2163 = vmax.f32 %v2023, 0.0
      %v2164 = vmax.f32 %v2026, 0.0
      %v2165 = vmax.f32 %v2031, 0.0
      %v2166 = vmax.f32 %v2034, 0.0
      %v2167 = vmax.f32 %v2039, 0.0
      %v2168 = vmax.f32 %v2042, 0.0
      %v2169 = vmax.f32 %v2047, 0.0
      %v2170 = vmax.f32 %v2050, 0.0
      %v2171 = vmax.f32 %v2055, 0.0
      %v2172 = vmax.f32 %v2058, 0.0
      %v2173 = vmax.f32 %v2063, 0.0
      %v2174 = vmax.f32 %v2066, 0.0
      %v2175 = vmax.f32 %v2071, 0.0
      %v2176 = vmax.f32 %v2074, 0.0
      %v2177 = vmax.f32 %v2079, 0.0
      %v2178 = vmax.f32 %v2082, 0.0
      %v2179 = vmax.f32 %v2087, 0.0
      %v2180 = vmax.f32 %v2090, 0.0
      %v2181 = vmax.f32 %v2095, 0.0
      %v2182 = vmax.f32 %v2098, 0.0
      %v2183 = vmax.f32 %v2103, 0.0
      %v2184 = vmax.f32 %v2106, 0.0
      %v2185 = vmax.f32 %v2111, 0.0
      %v2186 = vmax.f32 %v2114, 0.0
      %v2187 = vmax.f32 %v2119, 0.0
      %v2188 = vmax.f32 %v2122, 0.0
      %v2189 = vld [vmem:[%s7] sm:$0x1]
      %v2191 = vlaneseq
      %v2192 = vshrl.u32 %v2191, 7
      %v2193 = vsub.s32 0, %v2192
      %v2194 = vrot.slane %v2189, %v2193
      %v2196 = vmul.f32 %v2125, %v2194
      %v2197 = vmul.f32 %v2126, %v2194
      %v2198 = vmul.f32 %v2127, %v2194
      %v2199 = vmul.f32 %v2128, %v2194
      %v2200 = vmul.f32 %v2129, %v2194
      %v2201 = vmul.f32 %v2130, %v2194
      %v2202 = vmul.f32 %v2131, %v2194
      %v2203 = vmul.f32 %v2132, %v2194
      %v2204 = vmul.f32 %v2133, %v2194
      %v2205 = vmul.f32 %v2134, %v2194
      %v2206 = vmul.f32 %v2135, %v2194
      %v2207 = vmul.f32 %v2136, %v2194
      %v2208 = vmul.f32 %v2137, %v2194
      %v2209 = vmul.f32 %v2138, %v2194
      %v2210 = vmul.f32 %v2139, %v2194
      %v2211 = vmul.f32 %v2140, %v2194
      %v2212 = vmul.f32 %v2141, %v2194
      %v2213 = vmul.f32 %v2142, %v2194
      %v2214 = vmul.f32 %v2143, %v2194
      %v2215 = vmul.f32 %v2144, %v2194
      %v2216 = vmul.f32 %v2145, %v2194
      %v2217 = vmul.f32 %v2146, %v2194
      %v2218 = vmul.f32 %v2147, %v2194
      %v2219 = vmul.f32 %v2148, %v2194
      %v2220 = vmul.f32 %v2149, %v2194
      %v2221 = vmul.f32 %v2150, %v2194
      %v2222 = vmul.f32 %v2151, %v2194
      %v2223 = vmul.f32 %v2152, %v2194
      %v2224 = vmul.f32 %v2153, %v2194
      %v2225 = vmul.f32 %v2154, %v2194
      %v2226 = vmul.f32 %v2155, %v2194
      %v2227 = vmul.f32 %v2156, %v2194
      %v2228 = vmul.f32 %v2157, %v2194
      %v2229 = vmul.f32 %v2158, %v2194
      %v2230 = vmul.f32 %v2159, %v2194
      %v2231 = vmul.f32 %v2160, %v2194
      %v2232 = vmul.f32 %v2161, %v2194
      %v2233 = vmul.f32 %v2162, %v2194
      %v2234 = vmul.f32 %v2163, %v2194
      %v2235 = vmul.f32 %v2164, %v2194
      %v2236 = vmul.f32 %v2165, %v2194
      %v2237 = vmul.f32 %v2166, %v2194
      %v2238 = vmul.f32 %v2167, %v2194
      %v2239 = vmul.f32 %v2168, %v2194
      %v2240 = vmul.f32 %v2169, %v2194
      %v2241 = vmul.f32 %v2170, %v2194
      %v2242 = vmul.f32 %v2171, %v2194
      %v2243 = vmul.f32 %v2172, %v2194
      %v2244 = vmul.f32 %v2173, %v2194
      %v2245 = vmul.f32 %v2174, %v2194
      %v2246 = vmul.f32 %v2175, %v2194
      %v2247 = vmul.f32 %v2176, %v2194
      %v2248 = vmul.f32 %v2177, %v2194
      %v2249 = vmul.f32 %v2178, %v2194
      %v2250 = vmul.f32 %v2179, %v2194
      %v2251 = vmul.f32 %v2180, %v2194
      %v2252 = vmul.f32 %v2181, %v2194
      %v2253 = vmul.f32 %v2182, %v2194
      %v2254 = vmul.f32 %v2183, %v2194
      %v2255 = vmul.f32 %v2184, %v2194
      %v2256 = vmul.f32 %v2185, %v2194
      %v2257 = vmul.f32 %v2186, %v2194
      %v2258 = vmul.f32 %v2187, %v2194
      %v2259 = vmul.f32 %v2188, %v2194
      %2260 = vadd.xlane.f32.xlu0 %v2196
      %v2261 = vpop.xlane.xlu0 %2260
      %2262 = vadd.xlane.f32.xlu0 %v2197
      %v2263 = vpop.xlane.xlu0 %2262
      %2264 = vadd.xlane.f32.xlu0 %v2198
      %v2265 = vpop.xlane.xlu0 %2264
      %2266 = vadd.xlane.f32.xlu0 %v2199
      %v2267 = vpop.xlane.xlu0 %2266
      %2268 = vadd.xlane.f32.xlu0 %v2200
      %v2269 = vpop.xlane.xlu0 %2268
      %2270 = vadd.xlane.f32.xlu0 %v2201
      %v2271 = vpop.xlane.xlu0 %2270
      %2272 = vadd.xlane.f32.xlu0 %v2202
      %v2273 = vpop.xlane.xlu0 %2272
      %2274 = vadd.xlane.f32.xlu0 %v2203
      %v2275 = vpop.xlane.xlu0 %2274
      %2276 = vadd.xlane.f32.xlu0 %v2204
      %v2277 = vpop.xlane.xlu0 %2276
      %2278 = vadd.xlane.f32.xlu0 %v2205
      %v2279 = vpop.xlane.xlu0 %2278
      %2280 = vadd.xlane.f32.xlu0 %v2206
      %v2281 = vpop.xlane.xlu0 %2280
      %2282 = vadd.xlane.f32.xlu0 %v2207
      %v2283 = vpop.xlane.xlu0 %2282
      %2284 = vadd.xlane.f32.xlu0 %v2208
      %v2285 = vpop.xlane.xlu0 %2284
      %2286 = vadd.xlane.f32.xlu0 %v2209
      %v2287 = vpop.xlane.xlu0 %2286
      %2288 = vadd.xlane.f32.xlu0 %v2210
      %v2289 = vpop.xlane.xlu0 %2288
      %2290 = vadd.xlane.f32.xlu0 %v2211
      %v2291 = vpop.xlane.xlu0 %2290
      %2292 = vadd.xlane.f32.xlu0 %v2212
      %v2293 = vpop.xlane.xlu0 %2292
      %2294 = vadd.xlane.f32.xlu0 %v2213
      %v2295 = vpop.xlane.xlu0 %2294
      %2296 = vadd.xlane.f32.xlu0 %v2214
      %v2297 = vpop.xlane.xlu0 %2296
      %2298 = vadd.xlane.f32.xlu0 %v2215
      %v2299 = vpop.xlane.xlu0 %2298
      %2300 = vadd.xlane.f32.xlu0 %v2216
      %v2301 = vpop.xlane.xlu0 %2300
      %2302 = vadd.xlane.f32.xlu0 %v2217
      %v2303 = vpop.xlane.xlu0 %2302
      %2304 = vadd.xlane.f32.xlu0 %v2218
      %v2305 = vpop.xlane.xlu0 %2304
      %2306 = vadd.xlane.f32.xlu0 %v2219
      %v2307 = vpop.xlane.xlu0 %2306
      %2308 = vadd.xlane.f32.xlu0 %v2220
      %v2309 = vpop.xlane.xlu0 %2308
      %2310 = vadd.xlane.f32.xlu0 %v2221
      %v2311 = vpop.xlane.xlu0 %2310
      %2312 = vadd.xlane.f32.xlu0 %v2222
      %v2313 = vpop.xlane.xlu0 %2312
      %2314 = vadd.xlane.f32.xlu0 %v2223
      %v2315 = vpop.xlane.xlu0 %2314
      %2316 = vadd.xlane.f32.xlu0 %v2224
      %v2317 = vpop.xlane.xlu0 %2316
      %2318 = vadd.xlane.f32.xlu0 %v2225
      %v2319 = vpop.xlane.xlu0 %2318
      %2320 = vadd.xlane.f32.xlu0 %v2226
      %v2321 = vpop.xlane.xlu0 %2320
      %2322 = vadd.xlane.f32.xlu0 %v2227
      %v2323 = vpop.xlane.xlu0 %2322
      %2324 = vadd.xlane.f32.xlu0 %v2228
      %v2325 = vpop.xlane.xlu0 %2324
      %2326 = vadd.xlane.f32.xlu0 %v2229
      %v2327 = vpop.xlane.xlu0 %2326
      %2328 = vadd.xlane.f32.xlu0 %v2230
      %v2329 = vpop.xlane.xlu0 %2328
      %2330 = vadd.xlane.f32.xlu0 %v2231
      %v2331 = vpop.xlane.xlu0 %2330
      %2332 = vadd.xlane.f32.xlu0 %v2232
      %v2333 = vpop.xlane.xlu0 %2332
      %2334 = vadd.xlane.f32.xlu0 %v2233
      %v2335 = vpop.xlane.xlu0 %2334
      %2336 = vadd.xlane.f32.xlu0 %v2234
      %v2337 = vpop.xlane.xlu0 %2336
      %2338 = vadd.xlane.f32.xlu0 %v2235
      %v2339 = vpop.xlane.xlu0 %2338
      %2340 = vadd.xlane.f32.xlu0 %v2236
      %v2341 = vpop.xlane.xlu0 %2340
      %2342 = vadd.xlane.f32.xlu0 %v2237
      %v2343 = vpop.xlane.xlu0 %2342
      %2344 = vadd.xlane.f32.xlu0 %v2238
      %v2345 = vpop.xlane.xlu0 %2344
      %2346 = vadd.xlane.f32.xlu0 %v2239
      %v2347 = vpop.xlane.xlu0 %2346
      %2348 = vadd.xlane.f32.xlu0 %v2240
      %v2349 = vpop.xlane.xlu0 %2348
      %2350 = vadd.xlane.f32.xlu0 %v2241
      %v2351 = vpop.xlane.xlu0 %2350
      %2352 = vadd.xlane.f32.xlu0 %v2242
      %v2353 = vpop.xlane.xlu0 %2352
      %2354 = vadd.xlane.f32.xlu0 %v2243
      %v2355 = vpop.xlane.xlu0 %2354
      %2356 = vadd.xlane.f32.xlu0 %v2244
      %v2357 = vpop.xlane.xlu0 %2356
      %2358 = vadd.xlane.f32.xlu0 %v2245
      %v2359 = vpop.xlane.xlu0 %2358
      %2360 = vadd.xlane.f32.xlu0 %v2246
      %v2361 = vpop.xlane.xlu0 %2360
      %2362 = vadd.xlane.f32.xlu0 %v2247
      %v2363 = vpop.xlane.xlu0 %2362
      %2364 = vadd.xlane.f32.xlu0 %v2248
      %v2365 = vpop.xlane.xlu0 %2364
      %2366 = vadd.xlane.f32.xlu0 %v2249
      %v2367 = vpop.xlane.xlu0 %2366
      %2368 = vadd.xlane.f32.xlu0 %v2250
      %v2369 = vpop.xlane.xlu0 %2368
      %2370 = vadd.xlane.f32.xlu0 %v2251
      %v2371 = vpop.xlane.xlu0 %2370
      %2372 = vadd.xlane.f32.xlu0 %v2252
      %v2373 = vpop.xlane.xlu0 %2372
      %2374 = vadd.xlane.f32.xlu0 %v2253
      %v2375 = vpop.xlane.xlu0 %2374
      %2376 = vadd.xlane.f32.xlu0 %v2254
      %v2377 = vpop.xlane.xlu0 %2376
      %2378 = vadd.xlane.f32.xlu0 %v2255
      %v2379 = vpop.xlane.xlu0 %2378
      %2380 = vadd.xlane.f32.xlu0 %v2256
      %v2381 = vpop.xlane.xlu0 %2380
      %2382 = vadd.xlane.f32.xlu0 %v2257
      %v2383 = vpop.xlane.xlu0 %2382
      %2384 = vadd.xlane.f32.xlu0 %v2258
      %v2385 = vpop.xlane.xlu0 %2384
      %2386 = vadd.xlane.f32.xlu0 %v2259
      %v2387 = vpop.xlane.xlu0 %2386
      %v2388 = vld [vmem:[#allocation2] sm:$0x1]
      %v2390 = vlaneseq
      %v2391 = vshrl.u32 %v2390, 7
      %v2392 = vsub.s32 0, %v2391
      %v2393 = vrot.slane %v2388, %v2392
      %v2395 = vadd.f32 %v2261, %v2393
      %v2396 = vadd.f32 %v2263, %v2393
      %v2397 = vadd.f32 %v2265, %v2393
      %v2398 = vadd.f32 %v2267, %v2393
      %v2399 = vadd.f32 %v2269, %v2393
      %v2400 = vadd.f32 %v2271, %v2393
      %v2401 = vadd.f32 %v2273, %v2393
      %v2402 = vadd.f32 %v2275, %v2393
      %v2403 = vadd.f32 %v2277, %v2393
      %v2404 = vadd.f32 %v2279, %v2393
      %v2405 = vadd.f32 %v2281, %v2393
      %v2406 = vadd.f32 %v2283, %v2393
      %v2407 = vadd.f32 %v2285, %v2393
      %v2408 = vadd.f32 %v2287, %v2393
      %v2409 = vadd.f32 %v2289, %v2393
      %v2410 = vadd.f32 %v2291, %v2393
      %v2411 = vadd.f32 %v2293, %v2393
      %v2412 = vadd.f32 %v2295, %v2393
      %v2413 = vadd.f32 %v2297, %v2393
      %v2414 = vadd.f32 %v2299, %v2393
      %v2415 = vadd.f32 %v2301, %v2393
      %v2416 = vadd.f32 %v2303, %v2393
      %v2417 = vadd.f32 %v2305, %v2393
      %v2418 = vadd.f32 %v2307, %v2393
      %v2419 = vadd.f32 %v2309, %v2393
      %v2420 = vadd.f32 %v2311, %v2393
      %v2421 = vadd.f32 %v2313, %v2393
      %v2422 = vadd.f32 %v2315, %v2393
      %v2423 = vadd.f32 %v2317, %v2393
      %v2424 = vadd.f32 %v2319, %v2393
      %v2425 = vadd.f32 %v2321, %v2393
      %v2426 = vadd.f32 %v2323, %v2393
      %v2427 = vadd.f32 %v2325, %v2393
      %v2428 = vadd.f32 %v2327, %v2393
      %v2429 = vadd.f32 %v2329, %v2393
      %v2430 = vadd.f32 %v2331, %v2393
      %v2431 = vadd.f32 %v2333, %v2393
      %v2432 = vadd.f32 %v2335, %v2393
      %v2433 = vadd.f32 %v2337, %v2393
      %v2434 = vadd.f32 %v2339, %v2393
      %v2435 = vadd.f32 %v2341, %v2393
      %v2436 = vadd.f32 %v2343, %v2393
      %v2437 = vadd.f32 %v2345, %v2393
      %v2438 = vadd.f32 %v2347, %v2393
      %v2439 = vadd.f32 %v2349, %v2393
      %v2440 = vadd.f32 %v2351, %v2393
      %v2441 = vadd.f32 %v2353, %v2393
      %v2442 = vadd.f32 %v2355, %v2393
      %v2443 = vadd.f32 %v2357, %v2393
      %v2444 = vadd.f32 %v2359, %v2393
      %v2445 = vadd.f32 %v2361, %v2393
      %v2446 = vadd.f32 %v2363, %v2393
      %v2447 = vadd.f32 %v2365, %v2393
      %v2448 = vadd.f32 %v2367, %v2393
      %v2449 = vadd.f32 %v2369, %v2393
      %v2450 = vadd.f32 %v2371, %v2393
      %v2451 = vadd.f32 %v2373, %v2393
      %v2452 = vadd.f32 %v2375, %v2393
      %v2453 = vadd.f32 %v2377, %v2393
      %v2454 = vadd.f32 %v2379, %v2393
      %v2455 = vadd.f32 %v2381, %v2393
      %v2456 = vadd.f32 %v2383, %v2393
      %v2457 = vadd.f32 %v2385, %v2393
      %v2458 = vadd.f32 %v2387, %v2393
      %vm2459 = vcmask 7168
      %2460 = vst.msk [vmem:[%s336] sm:$0xff] %vm2459, %v2395
      %2461 = vst.msk [vmem:[%s336 + $0x8] sm:$0xff] %vm2459, %v2396
      %2462 = vst.msk [vmem:[%s336 + $0x10] sm:$0xff] %vm2459, %v2397
      %2463 = vst.msk [vmem:[%s336 + $0x18] sm:$0xff] %vm2459, %v2398
      %2464 = vst.msk [vmem:[%s336 + $0x20] sm:$0xff] %vm2459, %v2399
      %2465 = vst.msk [vmem:[%s336 + $0x28] sm:$0xff] %vm2459, %v2400
      %2466 = vst.msk [vmem:[%s336 + $0x30] sm:$0xff] %vm2459, %v2401
      %2467 = vst.msk [vmem:[%s336 + $0x38] sm:$0xff] %vm2459, %v2402
      %2468 = vst.msk [vmem:[%s336 + $0x40] sm:$0xff] %vm2459, %v2403
      %2469 = vst.msk [vmem:[%s336 + $0x48] sm:$0xff] %vm2459, %v2404
      %2470 = vst.msk [vmem:[%s336 + $0x50] sm:$0xff] %vm2459, %v2405
      %2471 = vst.msk [vmem:[%s336 + $0x58] sm:$0xff] %vm2459, %v2406
      %2472 = vst.msk [vmem:[%s336 + $0x60] sm:$0xff] %vm2459, %v2407
      %2473 = vst.msk [vmem:[%s336 + $0x68] sm:$0xff] %vm2459, %v2408
      %2474 = vst.msk [vmem:[%s336 + $0x70] sm:$0xff] %vm2459, %v2409
      %2475 = vst.msk [vmem:[%s336 + $0x78] sm:$0xff] %vm2459, %v2410
      %2476 = vst.msk [vmem:[%s336 + $0x80] sm:$0xff] %vm2459, %v2411
      %2477 = vst.msk [vmem:[%s336 + $0x88] sm:$0xff] %vm2459, %v2412
      %2478 = vst.msk [vmem:[%s336 + $0x90] sm:$0xff] %vm2459, %v2413
      %2479 = vst.msk [vmem:[%s336 + $0x98] sm:$0xff] %vm2459, %v2414
      %2480 = vst.msk [vmem:[%s336 + $0xa0] sm:$0xff] %vm2459, %v2415
      %2481 = vst.msk [vmem:[%s336 + $0xa8] sm:$0xff] %vm2459, %v2416
      %2482 = vst.msk [vmem:[%s336 + $0xb0] sm:$0xff] %vm2459, %v2417
      %2483 = vst.msk [vmem:[%s336 + $0xb8] sm:$0xff] %vm2459, %v2418
      %2484 = vst.msk [vmem:[%s336 + $0xc0] sm:$0xff] %vm2459, %v2419
      %2485 = vst.msk [vmem:[%s336 + $0xc8] sm:$0xff] %vm2459, %v2420
      %2486 = vst.msk [vmem:[%s336 + $0xd0] sm:$0xff] %vm2459, %v2421
      %2487 = vst.msk [vmem:[%s336 + $0xd8] sm:$0xff] %vm2459, %v2422
      %2488 = vst.msk [vmem:[%s336 + $0xe0] sm:$0xff] %vm2459, %v2423
      %2489 = vst.msk [vmem:[%s336 + $0xe8] sm:$0xff] %vm2459, %v2424
      %2490 = vst.msk [vmem:[%s336 + $0xf0] sm:$0xff] %vm2459, %v2425
      %2491 = vst.msk [vmem:[%s336 + $0xf8] sm:$0xff] %vm2459, %v2426
      %2492 = vst.msk [vmem:[%s336 + $0x100] sm:$0xff] %vm2459, %v2427
      %2493 = vst.msk [vmem:[%s336 + $0x108] sm:$0xff] %vm2459, %v2428
      %2494 = vst.msk [vmem:[%s336 + $0x110] sm:$0xff] %vm2459, %v2429
      %2495 = vst.msk [vmem:[%s336 + $0x118] sm:$0xff] %vm2459, %v2430
      %2496 = vst.msk [vmem:[%s336 + $0x120] sm:$0xff] %vm2459, %v2431
      %2497 = vst.msk [vmem:[%s336 + $0x128] sm:$0xff] %vm2459, %v2432
      %2498 = vst.msk [vmem:[%s336 + $0x130] sm:$0xff] %vm2459, %v2433
      %2499 = vst.msk [vmem:[%s336 + $0x138] sm:$0xff] %vm2459, %v2434
      %2500 = vst.msk [vmem:[%s336 + $0x140] sm:$0xff] %vm2459, %v2435
      %2501 = vst.msk [vmem:[%s336 + $0x148] sm:$0xff] %vm2459, %v2436
      %2502 = vst.msk [vmem:[%s336 + $0x150] sm:$0xff] %vm2459, %v2437
      %2503 = vst.msk [vmem:[%s336 + $0x158] sm:$0xff] %vm2459, %v2438
      %2504 = vst.msk [vmem:[%s336 + $0x160] sm:$0xff] %vm2459, %v2439
      %2505 = vst.msk [vmem:[%s336 + $0x168] sm:$0xff] %vm2459, %v2440
      %2506 = vst.msk [vmem:[%s336 + $0x170] sm:$0xff] %vm2459, %v2441
      %2507 = vst.msk [vmem:[%s336 + $0x178] sm:$0xff] %vm2459, %v2442
      %2508 = vst.msk [vmem:[%s336 + $0x180] sm:$0xff] %vm2459, %v2443
      %2509 = vst.msk [vmem:[%s336 + $0x188] sm:$0xff] %vm2459, %v2444
      %2510 = vst.msk [vmem:[%s336 + $0x190] sm:$0xff] %vm2459, %v2445
      %2511 = vst.msk [vmem:[%s336 + $0x198] sm:$0xff] %vm2459, %v2446
      %2512 = vst.msk [vmem:[%s336 + $0x1a0] sm:$0xff] %vm2459, %v2447
      %2513 = vst.msk [vmem:[%s336 + $0x1a8] sm:$0xff] %vm2459, %v2448
      %2514 = vst.msk [vmem:[%s336 + $0x1b0] sm:$0xff] %vm2459, %v2449
      %2515 = vst.msk [vmem:[%s336 + $0x1b8] sm:$0xff] %vm2459, %v2450
      %2516 = vst.msk [vmem:[%s336 + $0x1c0] sm:$0xff] %vm2459, %v2451
      %2517 = vst.msk [vmem:[%s336 + $0x1c8] sm:$0xff] %vm2459, %v2452
      %2518 = vst.msk [vmem:[%s336 + $0x1d0] sm:$0xff] %vm2459, %v2453
      %2519 = vst.msk [vmem:[%s336 + $0x1d8] sm:$0xff] %vm2459, %v2454
      %2520 = vst.msk [vmem:[%s336 + $0x1e0] sm:$0xff] %vm2459, %v2455
      %2521 = vst.msk [vmem:[%s336 + $0x1e8] sm:$0xff] %vm2459, %v2456
      %2522 = vst.msk [vmem:[%s336 + $0x1f0] sm:$0xff] %vm2459, %v2457
      %2523 = vst.msk [vmem:[%s336 + $0x1f8] sm:$0xff] %vm2459, %v2458
      %s2524 = smul.u32 64, %s22
      %p2525 = scmp.lt.s32.totalorder %s2524, 127
      %s2526 = scalar_select %p2525, %s2524, 127
      %s2527 = smul.addr %s2526, 8
      %s2528 = scalar_lea.vmem %s9, %s2527
      // Predicated region
      $region57: #{tpu_custom_call.1} parent=55 // pred_check
        %p2529 = pneg %p234
      $region58: #{tpu_custom_call.1} parent=55 // pred_check_branch
        %2531 = sbr.rel (%p2529) target = $region60
      $region59: #{tpu_custom_call.1} parent=55 // pred_region
        %s2532 = smul.u32 64, %s22
      $region60: #{tpu_custom_call.1} parent=55 // pred_fallthru
        _
    $region56: #{tpu_custom_call.1} parent=5 // pred_fallthru
      _
    %p2533 = scmp.le.s32.totalorder 2, %s17
    // Predicated region
    $region61: #{tpu_custom_call.1} parent=5 // pred_check
      %p2534 = pneg %p2533
    $region62: #{tpu_custom_call.1} parent=5 // pred_check_branch
      %2536 = sbr.rel (%p2534) target = $region64
    $region63: #{tpu_custom_call.1} parent=5 // pred_region
      %s2537 = ssub.s32 %s17, 2
      // Predicated region
      $region65: #{tpu_custom_call.1} parent=63 // pred_check
        %p2538 = pneg %p240
      $region66: #{tpu_custom_call.1} parent=63 // pred_check_branch
        %2540 = sbr.rel (%p2538) target = $region68
      $region67: #{tpu_custom_call.1} parent=63 // pred_region
        %s2541 = smul.u32 64, %s23
        %p2542 = scmp.lt.s32.totalorder %s2541, 127
        %s2543 = scalar_select %p2542, %s2541, 127
        %s2544 = smul.addr %s2543, 8
        %s2545 = scalar_lea.vmem %s9, %s2544
      $region68: #{tpu_custom_call.1} parent=63 // pred_fallthru
        _
    $region64: #{tpu_custom_call.1} parent=5 // pred_fallthru
      _
  $region6: #{tpu_custom_call.1} parent=0 // loop_footer
    %s21 = sadd.s32 1, %s17
  $region7: #{tpu_custom_call.1} parent=0 // loop_footer_branch
    %16 = sbr.rel target = $region3
  $region8: #{tpu_custom_call.1} parent=0 // loop_exit
    _

</llo_original>
